<compile_context>
chip_gen: v5e
topology: v5e:2x2
jax: 0.10.0
libtpu: 0.0.40
codegen_flags: <defaults>
</compile_context>

<pallas_src>
import functools

import jax
import jax.numpy as jnp
from jax import lax
from jax.experimental import pallas as pl
from jax.experimental.pallas import tpu as pltpu

_VMEM_LIMIT = 32 * 1024 * 1024


# ---------------------------------------------------------------------------
# small helpers
# ---------------------------------------------------------------------------
def _round_up(x, m):
    return ((x + m - 1) // m) * m


def _pick_tile(n, candidates):
    for c in candidates:
        if n % c == 0:
            return c
    return n


def _pad2(a, rows, cols):
    return jnp.pad(a, ((0, rows - a.shape[0]), (0, cols - a.shape[1])))


# ---------------------------------------------------------------------------
# Pallas kernels
# ---------------------------------------------------------------------------
def feature_transform_kernel(x_ref, w_ref, o_ref):
    """o = x @ w  (bf16 operands, f32 accumulation, bf16 output)."""
    o_ref[...] = jnp.dot(x_ref[...], w_ref[...],
                         preferred_element_type=jnp.float32).astype(o_ref.dtype)


def gcn_propagate_kernel(a_ref, xw_ref, b_ref, o_ref, acc_ref, *, apply_relu):
    """One GCNConv propagation tile:  o = A_norm @ XW + b  (optionally ReLU'd).

    grid = (N/tm, N/tk); k is the reduction over source-node tiles, accumulated in a
    (tm, D) f32 VMEM scratch buffer.
    """
    k = pl.program_id(1)

    @pl.when(k == 0)
    def _():
        acc_ref[...] = jnp.zeros_like(acc_ref)

    acc_ref[...] += jnp.dot(a_ref[...], xw_ref[...],
                            preferred_element_type=jnp.float32)

    @pl.when(k == pl.num_programs(1) - 1)
    def _():
        h = acc_ref[...] + b_ref[...]
        if apply_relu:
            h = jnp.maximum(h, 0.0)
        o_ref[...] = h


def _onehot_gather_t(idx_row, h2t):
    """Gather columns of h2t (= rows of h2) selected by idx_row.

    idx_row: (1, te) int32, h2t: (D_pad, N_pad) f32 -> (D_pad, te) f32.
    Expressed as h2^T @ one_hot so the gather runs on the MXU and the edge axis
    lands on lanes (lane-dense downstream reduce + store).
    """
    n_pad = h2t.shape[1]
    te = idx_row.shape[1]
    n_iota = lax.broadcasted_iota(jnp.int32, (n_pad, te), 0)
    onehot = (n_iota == idx_row).astype(jnp.float32)
    return jnp.dot(h2t, onehot, preferred_element_type=jnp.float32)


def inner_product_score_kernel(idx_ref, h2t_ref, o_ref):
    """sigmoid( sum_d h2[row]*h2[col] ) for one tile of 128 edges -> (1, te)."""
    h2t = h2t_ref[...]
    xr_t = _onehot_gather_t(idx_ref[0:1, :], h2t)
    xc_t = _onehot_gather_t(idx_ref[1:2, :], h2t)
    s = jnp.sum(xr_t * xc_t, axis=0, keepdims=True)        # (1, te) lane-dense
    o_ref[...] = jax.nn.sigmoid(s)


def concat_mlp_score_kernel(idx_ref, h2t_ref, w_ref, b_ref, o_ref):
    """sigmoid([h2[row]; h2[col]] @ W + b) without concatenate / width-1 matmul."""
    h2t = h2t_ref[...]
    xr_t = _onehot_gather_t(idx_ref[0:1, :], h2t)
    xc_t = _onehot_gather_t(idx_ref[1:2, :], h2t)
    w = w_ref[...]                    # (D_pad, 2): col 0 -> row half, col 1 -> col half
    s = jnp.sum(w[:, 0:1] * xr_t + w[:, 1:2] * xc_t, axis=0, keepdims=True)
    o_ref[...] = jax.nn.sigmoid(s + b_ref[...])


# ---------------------------------------------------------------------------
# pallas_call wrappers
# ---------------------------------------------------------------------------
def run_feature_transform(x_bf, w_bf):
    n_pad, f_pad = x_bf.shape
    d_pad = w_bf.shape[1]
    tm = _pick_tile(n_pad, (512, 256, 128))
    return pl.pallas_call(
        feature_transform_kernel,
        grid=(n_pad // tm,),
        in_specs=[pl.BlockSpec((tm, f_pad), lambda i: (i, 0)),
                  pl.BlockSpec((f_pad, d_pad), lambda i: (0, 0))],
        out_specs=pl.BlockSpec((tm, d_pad), lambda i: (i, 0)),
        out_shape=jax.ShapeDtypeStruct((n_pad, d_pad), jnp.bfloat16),
        compiler_params=pltpu.CompilerParams(
            dimension_semantics=("parallel",),
            vmem_limit_bytes=_VMEM_LIMIT),
    )(x_bf, w_bf)


def run_gcn_propagate(a_bf, xw_bf, b, *, apply_relu):
    n_pad = a_bf.shape[0]
    d_pad = xw_bf.shape[1]
    tm = _pick_tile(n_pad, (256, 128))
    tk = _pick_tile(n_pad, (512, 256, 128))
    kernel = functools.partial(gcn_propagate_kernel, apply_relu=apply_relu)
    return pl.pallas_call(
        kernel,
        grid=(n_pad // tm, n_pad // tk),
        in_specs=[pl.BlockSpec((tm, tk), lambda i, k: (i, k)),
                  pl.BlockSpec((tk, d_pad), lambda i, k: (k, 0)),
                  pl.BlockSpec((1, d_pad), lambda i, k: (0, 0))],
        out_specs=pl.BlockSpec((tm, d_pad), lambda i, k: (i, 0)),
        out_shape=jax.ShapeDtypeStruct((n_pad, d_pad), jnp.float32),
        scratch_shapes=[pltpu.VMEM((tm, d_pad), jnp.float32)],
        compiler_params=pltpu.CompilerParams(
            dimension_semantics=("parallel", "arbitrary"),
            vmem_limit_bytes=_VMEM_LIMIT),
    )(a_bf, xw_bf, b)


def run_inner_product_score(ei_pad, h2_t):
    d_pad, n_pad = h2_t.shape
    e_pad = ei_pad.shape[1]
    te = 128
    out = pl.pallas_call(
        inner_product_score_kernel,
        grid=(e_pad // te,),
        in_specs=[pl.BlockSpec((2, te), lambda e: (0, e)),
                  pl.BlockSpec((d_pad, n_pad), lambda e: (0, 0))],
        out_specs=pl.BlockSpec((1, te), lambda e: (0, e)),
        out_shape=jax.ShapeDtypeStruct((1, e_pad), jnp.float32),
        compiler_params=pltpu.CompilerParams(
            dimension_semantics=("parallel",),
            vmem_limit_bytes=_VMEM_LIMIT),
    )(ei_pad, h2_t)
    return out.reshape(-1)


def run_concat_mlp_score(ei_pad, h2_t, w_split, b):
    d_pad, n_pad = h2_t.shape
    e_pad = ei_pad.shape[1]
    te = 128
    out = pl.pallas_call(
        concat_mlp_score_kernel,
        grid=(e_pad // te,),
        in_specs=[pl.BlockSpec((2, te), lambda e: (0, e)),
                  pl.BlockSpec((d_pad, n_pad), lambda e: (0, 0)),
                  pl.BlockSpec((d_pad, 2), lambda e: (0, 0)),
                  pl.BlockSpec((1, 1), lambda e: (0, 0))],
        out_specs=pl.BlockSpec((1, te), lambda e: (0, e)),
        out_shape=jax.ShapeDtypeStruct((1, e_pad), jnp.float32),
        compiler_params=pltpu.CompilerParams(
            dimension_semantics=("parallel",),
            vmem_limit_bytes=_VMEM_LIMIT),
    )(ei_pad, h2_t, w_split, b)
    return out.reshape(-1)


# ---------------------------------------------------------------------------
# Graph preprocessing glue (matches PyG GCNConv's gcn_norm with self-loops)
# ---------------------------------------------------------------------------
def build_gcn_norm_adj(edge_index, edge_weight, num_nodes):
    row, col = edge_index[0], edge_index[1]         # row = source, col = target
    loop = jnp.arange(num_nodes, dtype=row.dtype)
    row = jnp.concatenate([row, loop])
    col = jnp.concatenate([col, loop])
    w = jnp.concatenate(
        [edge_weight, jnp.ones((num_nodes,), dtype=edge_weight.dtype)])
    deg = jnp.zeros((num_nodes,), edge_weight.dtype).at[col].add(w)
    dinv = jnp.where(deg > 0, lax.rsqrt(deg), 0.0)
    norm = dinv[row] * w * dinv[col]
    # a[i, j] = normalized weight of edge j -> i (aggregate sources into targets)
    return jnp.zeros((num_nodes, num_nodes), edge_weight.dtype).at[col, row].add(norm)


def glorot(key, shape):
    fan_in, fan_out = shape
    limit = jnp.sqrt(6.0 / (fan_in + fan_out))
    return jax.random.uniform(key, shape, jnp.float32, -limit, limit)


def init_gcnmasker_params(key, num_features, masker_dim):
    k1, k2, k3 = jax.random.split(key, 3)
    # NOTE: nn.Linear's default PyTorch init is kaiming-uniform; glorot is used here
    # (initialization choice only, not a forward-math difference).
    return {
        "w1": glorot(k1, (num_features, masker_dim)),
        "b1": jnp.zeros((1, masker_dim), jnp.float32),
        "w2": glorot(k2, (masker_dim, masker_dim)),
        "b2": jnp.zeros((1, masker_dim), jnp.float32),
        "mlp_w": glorot(k3, (masker_dim * 2, 1)),
        "mlp_b": jnp.zeros((1, 1), jnp.float32),
    }


# ---------------------------------------------------------------------------
# GCNmasker forward
# ---------------------------------------------------------------------------
@functools.partial(jax.jit, static_argnames=("score_function", "num_nodes"))
def gcnmasker_forward(params, x, edge_index, edge_weight, *, score_function,
                      num_nodes):
    n = num_nodes
    f_in = x.shape[1]
    d = params["w1"].shape[1]
    e = edge_index.shape[1]

    n_pad = _round_up(max(n, 128), 128)
    f_pad = _round_up(f_in, 128)
    d_pad = _round_up(d, 128)
    e_pad = _round_up(max(e, 128), 128)

    # Dense normalized adjacency (bf16, zero-padded): dominant HBM/VMEM operand.
    a_bf = _pad2(build_gcn_norm_adj(edge_index, edge_weight, n)
                 .astype(jnp.bfloat16), n_pad, n_pad)

    x_bf = _pad2(x, n_pad, f_pad).astype(jnp.bfloat16)
    w1_bf = _pad2(params["w1"], f_pad, d_pad).astype(jnp.bfloat16)
    w2_bf = _pad2(params["w2"], d_pad, d_pad).astype(jnp.bfloat16)
    b1 = _pad2(params["b1"], 1, d_pad)
    b2 = _pad2(params["b2"], 1, d_pad)

    # ---- GCNConv1 + ReLU (F.dropout with training=False is the identity) ----
    # TODO(synk): training-mode dropout (pltpu.prng_* mask) not emitted here.
    xw1 = run_feature_transform(x_bf, w1_bf)                     # (n_pad, d_pad) bf16
    h1 = run_gcn_propagate(a_bf, xw1, b1, apply_relu=True)       # f32

    # ---- GCNConv2 ----
    hw2 = run_feature_transform(h1.astype(jnp.bfloat16), w2_bf)  # bf16
    h2 = run_gcn_propagate(a_bf, hw2, b2, apply_relu=False)      # f32 (n_pad, d_pad)

    # ---- fused edge gather + scoring ----
    h2_t = h2.T                                                  # layout plumbing
    ei_pad = jnp.pad(edge_index.astype(jnp.int32), ((0, 0), (0, e_pad - e)))

    if score_function == "inner_product":
        scores = run_inner_product_score(ei_pad, h2_t)
    elif score_function == "concat_mlp":
        w_split = jnp.zeros((d_pad, 2), jnp.float32)
        w_split = w_split.at[:d, 0].set(params["mlp_w"][:d, 0])
        w_split = w_split.at[:d, 1].set(params["mlp_w"][d:, 0])
        scores = run_concat_mlp_score(ei_pad, h2_t, w_split,
                                      params["mlp_b"].reshape(1, 1))
    else:
        raise ValueError(f"unknown score_function: {score_function}")
    return scores[:e]


# ---------------------------------------------------------------------------
# Pure-JAX reference (same bf16 operand rounding as the kernels)
# ---------------------------------------------------------------------------
def gcnmasker_reference(params, x, edge_index, edge_weight, *, score_function,
                        num_nodes):
    bf = lambda v: v.astype(jnp.bfloat16)
    a = bf(build_gcn_norm_adj(edge_index, edge_weight, num_nodes))

    def conv(h, w, b):
        hw = bf(jnp.dot(bf(h), bf(w), preferred_element_type=jnp.float32))
        return jnp.dot(a, hw, preferred_element_type=jnp.float32) + b

    h1 = jnp.maximum(conv(x, params["w1"], params["b1"]), 0.0)
    h2 = conv(h1, params["w2"], params["b2"])
    row, col = edge_index[0], edge_index[1]
    xr, xc = h2[row], h2[col]
    if score_function == "inner_product":
        s = jnp.sum(xr * xc, axis=1)
    else:
        d = params["w1"].shape[1]
        s = (jnp.sum(xr * params["mlp_w"][:d, 0] + xc * params["mlp_w"][d:, 0],
                     axis=1) + params["mlp_b"].reshape(()))
    return jax.nn.sigmoid(s)


# ---------------------------------------------------------------------------
if __name__ == "__main__":
    key = jax.random.PRNGKey(0)
    k_param, k_x, k_edge, k_w = jax.random.split(key, 4)

    NUM_NODES = 16
    NUM_FEATURES = 8
    MASKER_DIM = 32
    NUM_EDGES = 40

    params = init_gcnmasker_params(k_param, NUM_FEATURES, MASKER_DIM)
    x = jax.random.normal(k_x, (NUM_NODES, NUM_FEATURES), jnp.float32)
    edge_index = jax.random.randint(k_edge, (2, NUM_EDGES), 0, NUM_NODES,
                                    dtype=jnp.int32)
    edge_weight = jax.random.uniform(k_w, (NUM_EDGES,), jnp.float32, 0.1, 1.0)

    for sf in ("inner_product", "concat_mlp"):
        out = gcnmasker_forward(params, x, edge_index, edge_weight,
                                score_function=sf, num_nodes=NUM_NODES)
        out = jax.block_until_ready(out)
        ref = gcnmasker_reference(params, x, edge_index, edge_weight,
                                  score_function=sf, num_nodes=NUM_NODES)
        assert out.shape == (NUM_EDGES,)
        assert bool(jnp.all(jnp.isfinite(out)))
        err = float(jnp.max(jnp.abs(out - ref)))
        assert err < 1e-2, f"{sf}: max |err| = {err}"
    print("KERNEL_OK")
</pallas_src>

<mosaic_0001>
module attributes {stable_mosaic.version = 11 : i64} {
  func.func @feature_transform_kernel(%arg0: i32, %arg1: memref<128x128xbf16, #tpu.memory_space<vmem>>, %arg2: memref<128x128xbf16, #tpu.memory_space<vmem>>, %arg3: memref<128x128xbf16, #tpu.memory_space<vmem>>) attributes {dimension_semantics = [#tpu.dimension_semantics<parallel>], iteration_bounds = array<i64: 1>, scalar_prefetch = 0 : i64, scratch_operands = 0 : i64, tpu.core_type = #tpu.core_type<tc>, window_params = [{transform_indices = @transform_0, window_bounds = array<i64: 128, 128>}, {pipeline_mode = #tpu.pipeline_mode<synchronous>, transform_indices = @transform_1, window_bounds = array<i64: 128, 128>}, {transform_indices = @transform_2, window_bounds = array<i64: 128, 128>}]} {
    %c0 = arith.constant 0 : index
    %c0_0 = arith.constant 0 : index
    %0 = vector.load %arg1[%c0, %c0_0] : memref<128x128xbf16, #tpu.memory_space<vmem>>, vector<128x128xbf16>
    %c0_1 = arith.constant 0 : index
    %c0_2 = arith.constant 0 : index
    %1 = vector.load %arg2[%c0_1, %c0_2] : memref<128x128xbf16, #tpu.memory_space<vmem>>, vector<128x128xbf16>
    %cst = arith.constant dense<0.000000e+00> : vector<128x128xf32>
    %2 = tpu.matmul %0, %1, %cst {dimension_numbers = #tpu.dot_dimension_numbers<[1], [0], [0], [1], [0, 0, 1, 1], [], []>} : vector<128x128xbf16>, vector<128x128xbf16>, vector<128x128xf32> -> vector<128x128xf32>
    %3 = arith.truncf %2 : vector<128x128xf32> to vector<128x128xbf16>
    %c0_3 = arith.constant 0 : index
    %c0_4 = arith.constant 0 : index
    %4 = vector.load %arg3[%c0_3, %c0_4] : memref<128x128xbf16, #tpu.memory_space<vmem>>, vector<128x128xbf16>
    tpu.vector_store %arg3[%c0_3, %c0_4], %3 {strides = array<i32>} : memref<128x128xbf16, #tpu.memory_space<vmem>>, vector<128x128xbf16>,
    return
  }
  func.func @transform_0(%arg0: i32) -> (i32, i32) {
    %c0_i32 = arith.constant 0 : i32
    %c0_i32_0 = arith.constant 0 : i32
    return %arg0, %c0_i32 : i32, i32
  }
  func.func @transform_1(%arg0: i32) -> (i32, i32) {
    %c0_i32 = arith.constant 0 : i32
    %c0_i32_0 = arith.constant 0 : i32
    %c0_i32_1 = arith.constant 0 : i32
    return %c0_i32, %c0_i32_0 : i32, i32
  }
  func.func @transform_2(%arg0: i32) -> (i32, i32) {
    %c0_i32 = arith.constant 0 : i32
    %c0_i32_0 = arith.constant 0 : i32
    return %arg0, %c0_i32 : i32, i32
  }
}

module attributes {stable_mosaic.version = 11 : i64} {
  func.func @gcn_propagate_kernel(%arg0: i32, %arg1: i32, %arg2: memref<128x128xbf16, #tpu.memory_space<vmem>>, %arg3: memref<128x128xbf16, #tpu.memory_space<vmem>>, %arg4: memref<1x128xf32, #tpu.memory_space<vmem>>, %arg5: memref<128x128xf32, #tpu.memory_space<vmem>>, %arg6: memref<128x128xf32, #tpu.memory_space<vmem>>) attributes {dimension_semantics = [#tpu.dimension_semantics<parallel>, #tpu.dimension_semantics<arbitrary>], iteration_bounds = array<i64: 1, 1>, scalar_prefetch = 0 : i64, scratch_operands = 1 : i64, tpu.core_type = #tpu.core_type<tc>, window_params = [{transform_indices = @transform_0, window_bounds = array<i64: 128, 128>}, {transform_indices = @transform_1, window_bounds = array<i64: 128, 128>}, {pipeline_mode = #tpu.pipeline_mode<synchronous>, transform_indices = @transform_2, window_bounds = array<i64: 1, 128>}, {transform_indices = @transform_3, window_bounds = array<i64: 128, 128>}]} {
    %c0_i32 = arith.constant 0 : i32
    %0 = arith.cmpi eq, %arg1, %c0_i32 : i32
    %1 = arith.extui %0 : i1 to i32
    %c0_i32_0 = arith.constant 0 : i32
    %2 = arith.cmpi ne, %1, %c0_i32_0 : i32
    scf.if %2 {
      %cst_10 = arith.constant 0.000000e+00 : f32
      %12 = vector.broadcast %cst_10 : f32 to vector<128x128xf32>
      %c0_11 = arith.constant 0 : index
      %c0_12 = arith.constant 0 : index
      %13 = vector.load %arg6[%c0_11, %c0_12] : memref<128x128xf32, #tpu.memory_space<vmem>>, vector<128x128xf32>
      tpu.vector_store %arg6[%c0_11, %c0_12], %12 {strides = array<i32>} : memref<128x128xf32, #tpu.memory_space<vmem>>, vector<128x128xf32>,
    } else {
    }
    %c0 = arith.constant 0 : index
    %c0_1 = arith.constant 0 : index
    %3 = vector.load %arg6[%c0, %c0_1] : memref<128x128xf32, #tpu.memory_space<vmem>>, vector<128x128xf32>
    %c0_2 = arith.constant 0 : index
    %c0_3 = arith.constant 0 : index
    %4 = vector.load %arg2[%c0_2, %c0_3] : memref<128x128xbf16, #tpu.memory_space<vmem>>, vector<128x128xbf16>
    %c0_4 = arith.constant 0 : index
    %c0_5 = arith.constant 0 : index
    %5 = vector.load %arg3[%c0_4, %c0_5] : memref<128x128xbf16, #tpu.memory_space<vmem>>, vector<128x128xbf16>
    %cst = arith.constant dense<0.000000e+00> : vector<128x128xf32>
    %6 = tpu.matmul %4, %5, %cst {dimension_numbers = #tpu.dot_dimension_numbers<[1], [0], [0], [1], [0, 0, 1, 1], [], []>} : vector<128x128xbf16>, vector<128x128xbf16>, vector<128x128xf32> -> vector<128x128xf32>
    %7 = arith.addf %3, %6 : vector<128x128xf32>
    %c0_6 = arith.constant 0 : index
    %c0_7 = arith.constant 0 : index
    %8 = vector.load %arg6[%c0_6, %c0_7] : memref<128x128xf32, #tpu.memory_space<vmem>>, vector<128x128xf32>
    tpu.vector_store %arg6[%c0_6, %c0_7], %7 {strides = array<i32>} : memref<128x128xf32, #tpu.memory_space<vmem>>, vector<128x128xf32>,
    %c0_i32_8 = arith.constant 0 : i32
    %9 = arith.cmpi eq, %arg1, %c0_i32_8 : i32
    %10 = arith.extui %9 : i1 to i32
    %c0_i32_9 = arith.constant 0 : i32
    %11 = arith.cmpi ne, %10, %c0_i32_9 : i32
    scf.if %11 {
      %c0_10 = arith.constant 0 : index
      %c0_11 = arith.constant 0 : index
      %12 = vector.load %arg6[%c0_10, %c0_11] : memref<128x128xf32, #tpu.memory_space<vmem>>, vector<128x128xf32>
      %c0_12 = arith.constant 0 : index
      %c0_13 = arith.constant 0 : index
      %13 = vector.load %arg4[%c0_12, %c0_13] : memref<1x128xf32, #tpu.memory_space<vmem>>, vector<1x128xf32>
      %14 = vector.broadcast %13 : vector<1x128xf32> to vector<128x128xf32>
      %15 = arith.addf %12, %14 : vector<128x128xf32>
      %cst_14 = arith.constant 0.000000e+00 : f32
      %16 = vector.broadcast %cst_14 : f32 to vector<128x128xf32>
      %17 = arith.maximumf %15, %16 : vector<128x128xf32>
      %c0_15 = arith.constant 0 : index
      %c0_16 = arith.constant 0 : index
      %18 = vector.load %arg5[%c0_15, %c0_16] : memref<128x128xf32, #tpu.memory_space<vmem>>, vector<128x128xf32>
      tpu.vector_store %arg5[%c0_15, %c0_16], %17 {strides = array<i32>} : memref<128x128xf32, #tpu.memory_space<vmem>>, vector<128x128xf32>,
    } else {
    }
    return
  }
  func.func @transform_0(%arg0: i32, %arg1: i32) -> (i32, i32) {
    %c0_i32 = arith.constant 0 : i32
    return %arg0, %arg1 : i32, i32
  }
  func.func @transform_1(%arg0: i32, %arg1: i32) -> (i32, i32) {
    %c0_i32 = arith.constant 0 : i32
    %c0_i32_0 = arith.constant 0 : i32
    return %arg1, %c0_i32 : i32, i32
  }
  func.func @transform_2(%arg0: i32, %arg1: i32) -> (i32, i32) {
    %c0_i32 = arith.constant 0 : i32
    %c0_i32_0 = arith.constant 0 : i32
    %c0_i32_1 = arith.constant 0 : i32
    return %c0_i32, %c0_i32_0 : i32, i32
  }
  func.func @transform_3(%arg0: i32, %arg1: i32) -> (i32, i32) {
    %c0_i32 = arith.constant 0 : i32
    %c0_i32_0 = arith.constant 0 : i32
    return %arg0, %c0_i32 : i32, i32
  }
}

module attributes {stable_mosaic.version = 11 : i64} {
  func.func @gcn_propagate_kernel(%arg0: i32, %arg1: i32, %arg2: memref<128x128xbf16, #tpu.memory_space<vmem>>, %arg3: memref<128x128xbf16, #tpu.memory_space<vmem>>, %arg4: memref<1x128xf32, #tpu.memory_space<vmem>>, %arg5: memref<128x128xf32, #tpu.memory_space<vmem>>, %arg6: memref<128x128xf32, #tpu.memory_space<vmem>>) attributes {dimension_semantics = [#tpu.dimension_semantics<parallel>, #tpu.dimension_semantics<arbitrary>], iteration_bounds = array<i64: 1, 1>, scalar_prefetch = 0 : i64, scratch_operands = 1 : i64, tpu.core_type = #tpu.core_type<tc>, window_params = [{transform_indices = @transform_0, window_bounds = array<i64: 128, 128>}, {transform_indices = @transform_1, window_bounds = array<i64: 128, 128>}, {pipeline_mode = #tpu.pipeline_mode<synchronous>, transform_indices = @transform_2, window_bounds = array<i64: 1, 128>}, {transform_indices = @transform_3, window_bounds = array<i64: 128, 128>}]} {
    %c0_i32 = arith.constant 0 : i32
    %0 = arith.cmpi eq, %arg1, %c0_i32 : i32
    %1 = arith.extui %0 : i1 to i32
    %c0_i32_0 = arith.constant 0 : i32
    %2 = arith.cmpi ne, %1, %c0_i32_0 : i32
    scf.if %2 {
      %cst_10 = arith.constant 0.000000e+00 : f32
      %12 = vector.broadcast %cst_10 : f32 to vector<128x128xf32>
      %c0_11 = arith.constant 0 : index
      %c0_12 = arith.constant 0 : index
      %13 = vector.load %arg6[%c0_11, %c0_12] : memref<128x128xf32, #tpu.memory_space<vmem>>, vector<128x128xf32>
      tpu.vector_store %arg6[%c0_11, %c0_12], %12 {strides = array<i32>} : memref<128x128xf32, #tpu.memory_space<vmem>>, vector<128x128xf32>,
    } else {
    }
    %c0 = arith.constant 0 : index
    %c0_1 = arith.constant 0 : index
    %3 = vector.load %arg6[%c0, %c0_1] : memref<128x128xf32, #tpu.memory_space<vmem>>, vector<128x128xf32>
    %c0_2 = arith.constant 0 : index
    %c0_3 = arith.constant 0 : index
    %4 = vector.load %arg2[%c0_2, %c0_3] : memref<128x128xbf16, #tpu.memory_space<vmem>>, vector<128x128xbf16>
    %c0_4 = arith.constant 0 : index
    %c0_5 = arith.constant 0 : index
    %5 = vector.load %arg3[%c0_4, %c0_5] : memref<128x128xbf16, #tpu.memory_space<vmem>>, vector<128x128xbf16>
    %cst = arith.constant dense<0.000000e+00> : vector<128x128xf32>
    %6 = tpu.matmul %4, %5, %cst {dimension_numbers = #tpu.dot_dimension_numbers<[1], [0], [0], [1], [0, 0, 1, 1], [], []>} : vector<128x128xbf16>, vector<128x128xbf16>, vector<128x128xf32> -> vector<128x128xf32>
    %7 = arith.addf %3, %6 : vector<128x128xf32>
    %c0_6 = arith.constant 0 : index
    %c0_7 = arith.constant 0 : index
    %8 = vector.load %arg6[%c0_6, %c0_7] : memref<128x128xf32, #tpu.memory_space<vmem>>, vector<128x128xf32>
    tpu.vector_store %arg6[%c0_6, %c0_7], %7 {strides = array<i32>} : memref<128x128xf32, #tpu.memory_space<vmem>>, vector<128x128xf32>,
    %c0_i32_8 = arith.constant 0 : i32
    %9 = arith.cmpi eq, %arg1, %c0_i32_8 : i32
    %10 = arith.extui %9 : i1 to i32
    %c0_i32_9 = arith.constant 0 : i32
    %11 = arith.cmpi ne, %10, %c0_i32_9 : i32
    scf.if %11 {
      %c0_10 = arith.constant 0 : index
      %c0_11 = arith.constant 0 : index
      %12 = vector.load %arg6[%c0_10, %c0_11] : memref<128x128xf32, #tpu.memory_space<vmem>>, vector<128x128xf32>
      %c0_12 = arith.constant 0 : index
      %c0_13 = arith.constant 0 : index
      %13 = vector.load %arg4[%c0_12, %c0_13] : memref<1x128xf32, #tpu.memory_space<vmem>>, vector<1x128xf32>
      %14 = vector.broadcast %13 : vector<1x128xf32> to vector<128x128xf32>
      %15 = arith.addf %12, %14 : vector<128x128xf32>
      %c0_14 = arith.constant 0 : index
      %c0_15 = arith.constant 0 : index
      %16 = vector.load %arg5[%c0_14, %c0_15] : memref<128x128xf32, #tpu.memory_space<vmem>>, vector<128x128xf32>
      tpu.vector_store %arg5[%c0_14, %c0_15], %15 {strides = array<i32>} : memref<128x128xf32, #tpu.memory_space<vmem>>, vector<128x128xf32>,
    } else {
    }
    return
  }
  func.func @transform_0(%arg0: i32, %arg1: i32) -> (i32, i32) {
    %c0_i32 = arith.constant 0 : i32
    return %arg0, %arg1 : i32, i32
  }
  func.func @transform_1(%arg0: i32, %arg1: i32) -> (i32, i32) {
    %c0_i32 = arith.constant 0 : i32
    %c0_i32_0 = arith.constant 0 : i32
    return %arg1, %c0_i32 : i32, i32
  }
  func.func @transform_2(%arg0: i32, %arg1: i32) -> (i32, i32) {
    %c0_i32 = arith.constant 0 : i32
    %c0_i32_0 = arith.constant 0 : i32
    %c0_i32_1 = arith.constant 0 : i32
    return %c0_i32, %c0_i32_0 : i32, i32
  }
  func.func @transform_3(%arg0: i32, %arg1: i32) -> (i32, i32) {
    %c0_i32 = arith.constant 0 : i32
    %c0_i32_0 = arith.constant 0 : i32
    return %arg0, %c0_i32 : i32, i32
  }
}

module attributes {stable_mosaic.version = 11 : i64} {
  func.func @inner_product_score_kernel(%arg0: i32, %arg1: memref<2x128xi32, #tpu.memory_space<vmem>>, %arg2: memref<128x128xf32, #tpu.memory_space<vmem>>, %arg3: memref<1x128xf32, #tpu.memory_space<vmem>>) attributes {dimension_semantics = [#tpu.dimension_semantics<parallel>], iteration_bounds = array<i64: 1>, scalar_prefetch = 0 : i64, scratch_operands = 0 : i64, tpu.core_type = #tpu.core_type<tc>, window_params = [{transform_indices = @transform_0, window_bounds = array<i64: 2, 128>}, {pipeline_mode = #tpu.pipeline_mode<synchronous>, transform_indices = @transform_1, window_bounds = array<i64: 128, 128>}, {transform_indices = @transform_2, window_bounds = array<i64: 1, 128>}]} {
    %c0 = arith.constant 0 : index
    %c0_0 = arith.constant 0 : index
    %0 = vector.load %arg2[%c0, %c0_0] : memref<128x128xf32, #tpu.memory_space<vmem>>, vector<128x128xf32>
    %c0_1 = arith.constant 0 : index
    %c0_2 = arith.constant 0 : index
    %1 = vector.load %arg1[%c0_1, %c0_2] : memref<2x128xi32, #tpu.memory_space<vmem>>, vector<1x128xi32>
    %2 = tpu.iota {dimensions = array<i32: 0>} : vector<128x128xi32>
    %3 = vector.broadcast %1 : vector<1x128xi32> to vector<128x128xi32>
    %4 = arith.cmpi eq, %2, %3 : vector<128x128xi32>
    %5 = arith.extui %4 : vector<128x128xi1> to vector<128x128xi32>
    %6 = arith.sitofp %5 : vector<128x128xi32> to vector<128x128xf32>
    %cst = arith.constant dense<0.000000e+00> : vector<128x128xf32>
    %7 = tpu.matmul %0, %6, %cst {dimension_numbers = #tpu.dot_dimension_numbers<[1], [0], [0], [1], [0, 0, 1, 1], [], []>} : vector<128x128xf32>, vector<128x128xf32>, vector<128x128xf32> -> vector<128x128xf32>
    %c1 = arith.constant 1 : index
    %c0_3 = arith.constant 0 : index
    %8 = vector.load %arg1[%c1, %c0_3] : memref<2x128xi32, #tpu.memory_space<vmem>>, vector<1x128xi32>
    %9 = tpu.iota {dimensions = array<i32: 0>} : vector<128x128xi32>
    %10 = vector.broadcast %8 : vector<1x128xi32> to vector<128x128xi32>
    %11 = arith.cmpi eq, %9, %10 : vector<128x128xi32>
    %12 = arith.extui %11 : vector<128x128xi1> to vector<128x128xi32>
    %13 = arith.sitofp %12 : vector<128x128xi32> to vector<128x128xf32>
    %cst_4 = arith.constant dense<0.000000e+00> : vector<128x128xf32>
    %14 = tpu.matmul %0, %13, %cst_4 {dimension_numbers = #tpu.dot_dimension_numbers<[1], [0], [0], [1], [0, 0, 1, 1], [], []>} : vector<128x128xf32>, vector<128x128xf32>, vector<128x128xf32> -> vector<128x128xf32>
    %15 = arith.mulf %7, %14 : vector<128x128xf32>
    %cst_5 = arith.constant dense<0.000000e+00> : vector<128xf32>
    %16 = vector.multi_reduction <add>, %15, %cst_5 [0] : vector<128x128xf32> to vector<128xf32>
    %17 = vector.shape_cast %16 : vector<128xf32> to vector<1x128xf32>
    %18 = arith.negf %17 : vector<1x128xf32>
    %19 = math.exp %18 : vector<1x128xf32>
    %cst_6 = arith.constant 1.000000e+00 : f32
    %20 = vector.broadcast %cst_6 : f32 to vector<1x128xf32>
    %21 = arith.addf %20, %19 : vector<1x128xf32>
    %22 = arith.divf %20, %21 : vector<1x128xf32>
    %c0_7 = arith.constant 0 : index
    %c0_8 = arith.constant 0 : index
    %23 = vector.load %arg3[%c0_7, %c0_8] : memref<1x128xf32, #tpu.memory_space<vmem>>, vector<1x128xf32>
    tpu.vector_store %arg3[%c0_7, %c0_8], %22 {strides = array<i32>} : memref<1x128xf32, #tpu.memory_space<vmem>>, vector<1x128xf32>,
    return
  }
  func.func @transform_0(%arg0: i32) -> (i32, i32) {
    %c0_i32 = arith.constant 0 : i32
    %c0_i32_0 = arith.constant 0 : i32
    return %c0_i32, %arg0 : i32, i32
  }
  func.func @transform_1(%arg0: i32) -> (i32, i32) {
    %c0_i32 = arith.constant 0 : i32
    %c0_i32_0 = arith.constant 0 : i32
    %c0_i32_1 = arith.constant 0 : i32
    return %c0_i32, %c0_i32_0 : i32, i32
  }
  func.func @transform_2(%arg0: i32) -> (i32, i32) {
    %c0_i32 = arith.constant 0 : i32
    %c0_i32_0 = arith.constant 0 : i32
    return %c0_i32, %arg0 : i32, i32
  }
}

</mosaic_0001>

<llo_original>
// kernel: gcnmasker_forward.5
$region0: #{gcnmasker_forward.5}
  #allocation0 [shape = 'u32[]', space=smem, size = 0x4, offset = 0x4, fixed_abs, tag = 'smem constant byte address 0x4 - core index']
  #allocation1 [shape = 'u32[72,128]{1,0:T(1,128)}', space=vmem, size = 0x9000, scoped, tag = 'internal scratch']
  %s0 = inlined_call_operand.vmem [shape: bf16[128,128], index: 0, kind: input, shape index: {}]
  %s1 = inlined_call_operand.vmem [shape: bf16[128,128], index: 1, kind: input, shape index: {}]
  %s2 = inlined_call_operand.vmem [shape: bf16[128,128], index: 2, kind: output, shape index: {}]
  %s3 = sld [smem:[#allocation0]]
  $region18: #{gcnmasker_forward.5} parent=0
    _
  %s5 = ssub.s32 1, %s3
  %s6 = scalar_select 0, %s5, %s3
  // Predicated region
  $region2: #{gcnmasker_forward.5} parent=0 // pred_check
    _
  $region3: #{gcnmasker_forward.5} parent=0 // pred_check_branch
    %8 = sbr.rel (0) target = $region5
  $region4: #{gcnmasker_forward.5} parent=0 // pred_region
    _
  $region5: #{gcnmasker_forward.5} parent=0 // pred_fallthru
    _
  // Predicated region
  $region6: #{gcnmasker_forward.5} parent=0 // pred_check
    _
  $region7: #{gcnmasker_forward.5} parent=0 // pred_check_branch
    %10 = sbr.rel (0) target = $region9
  $region8: #{gcnmasker_forward.5} parent=0 // pred_region
    _
  $region9: #{gcnmasker_forward.5} parent=0 // pred_fallthru
    _
  %v11 = vld [vmem:[%s0] sm:$0xf]
  %v12 = vld [vmem:[%s0 + $0x4] sm:$0xf]
  %v13 = vld [vmem:[%s0 + $0x8] sm:$0xf]
  %v14 = vld [vmem:[%s0 + $0xc] sm:$0xf]
  %v15 = vld [vmem:[%s0 + $0x10] sm:$0xf]
  %v16 = vld [vmem:[%s0 + $0x14] sm:$0xf]
  %v17 = vld [vmem:[%s0 + $0x18] sm:$0xf]
  %v18 = vld [vmem:[%s0 + $0x1c] sm:$0xf]
  %v19 = vld [vmem:[%s0 + $0x20] sm:$0xf]
  %v20 = vld [vmem:[%s0 + $0x24] sm:$0xf]
  %v21 = vld [vmem:[%s0 + $0x28] sm:$0xf]
  %v22 = vld [vmem:[%s0 + $0x2c] sm:$0xf]
  %v23 = vld [vmem:[%s0 + $0x30] sm:$0xf]
  %v24 = vld [vmem:[%s0 + $0x34] sm:$0xf]
  %v25 = vld [vmem:[%s0 + $0x38] sm:$0xf]
  %v26 = vld [vmem:[%s0 + $0x3c] sm:$0xf]
  %v27 = vld [vmem:[%s1] sm:$0xf]
  %v28 = vld [vmem:[%s1 + $0x4] sm:$0xf]
  %v29 = vld [vmem:[%s1 + $0x8] sm:$0xf]
  %v30 = vld [vmem:[%s1 + $0xc] sm:$0xf]
  %v31 = vld [vmem:[%s1 + $0x10] sm:$0xf]
  %v32 = vld [vmem:[%s1 + $0x14] sm:$0xf]
  %v33 = vld [vmem:[%s1 + $0x18] sm:$0xf]
  %v34 = vld [vmem:[%s1 + $0x1c] sm:$0xf]
  %v35 = vld [vmem:[%s1 + $0x20] sm:$0xf]
  %v36 = vld [vmem:[%s1 + $0x24] sm:$0xf]
  %v37 = vld [vmem:[%s1 + $0x28] sm:$0xf]
  %v38 = vld [vmem:[%s1 + $0x2c] sm:$0xf]
  %v39 = vld [vmem:[%s1 + $0x30] sm:$0xf]
  %v40 = vld [vmem:[%s1 + $0x34] sm:$0xf]
  %v41 = vld [vmem:[%s1 + $0x38] sm:$0xf]
  %v42 = vld [vmem:[%s1 + $0x3c] sm:$0xf]
  %v59 = vunpack.c.l.b16 %v11
  %v60 = vunpack.c.l.b16 %v12
  %v61 = vunpack.c.l.b16 %v13
  %v62 = vunpack.c.l.b16 %v14
  %v63 = vunpack.c.l.b16 %v15
  %v64 = vunpack.c.l.b16 %v16
  %v65 = vunpack.c.l.b16 %v17
  %v66 = vunpack.c.l.b16 %v18
  %v67 = vunpack.c.l.b16 %v19
  %v68 = vunpack.c.l.b16 %v20
  %v69 = vunpack.c.l.b16 %v21
  %v70 = vunpack.c.l.b16 %v22
  %v71 = vunpack.c.l.b16 %v23
  %v72 = vunpack.c.l.b16 %v24
  %v73 = vunpack.c.l.b16 %v25
  %v74 = vunpack.c.l.b16 %v26
  %v75 = vpack.c.b16 %v60, %v59
  %v76 = vpack.c.b16 %v62, %v61
  %v77 = vpack.c.b16 %v64, %v63
  %v78 = vpack.c.b16 %v66, %v65
  %v79 = vpack.c.b16 %v68, %v67
  %v80 = vpack.c.b16 %v70, %v69
  %v81 = vpack.c.b16 %v72, %v71
  %v82 = vpack.c.b16 %v74, %v73
  %v107 = vunpack.c.l.b16 %v27
  %v108 = vunpack.c.l.b16 %v28
  %v109 = vunpack.c.l.b16 %v29
  %v110 = vunpack.c.l.b16 %v30
  %v111 = vunpack.c.l.b16 %v31
  %v112 = vunpack.c.l.b16 %v32
  %v113 = vunpack.c.l.b16 %v33
  %v114 = vunpack.c.l.b16 %v34
  %v115 = vunpack.c.l.b16 %v35
  %v116 = vunpack.c.l.b16 %v36
  %v117 = vunpack.c.l.b16 %v37
  %v118 = vunpack.c.l.b16 %v38
  %v119 = vunpack.c.l.b16 %v39
  %v120 = vunpack.c.l.b16 %v40
  %v121 = vunpack.c.l.b16 %v41
  %v122 = vunpack.c.l.b16 %v42
  %v123 = vpack.c.b16 %v108, %v107
  %v124 = vpack.c.b16 %v110, %v109
  %v125 = vpack.c.b16 %v112, %v111
  %v126 = vpack.c.b16 %v114, %v113
  %v127 = vpack.c.b16 %v116, %v115
  %v128 = vpack.c.b16 %v118, %v117
  %v129 = vpack.c.b16 %v120, %v119
  %v130 = vpack.c.b16 %v122, %v121
  %139 = vmatpush.bf16.msra.mxu0 %v130
  %140 = vmatpush.bf16.msra.mxu0 %v129
  %141 = vmatpush.bf16.msra.mxu0 %v128
  %142 = vmatpush.bf16.msra.mxu0 %v127
  %143 = vmatpush.bf16.msra.mxu0 %v126
  %144 = vmatpush.bf16.msra.mxu0 %v125
  %145 = vmatpush.bf16.msra.mxu0 %v124
  %146 = vmatpush.bf16.msra.mxu0 %v123
  %147 = vmatmul.bf16.gmra.mxu0 %v75
  %v148 = vpop.f32.mrf.mxu0
  %v149 = vadd.f32 0.0, %v148
  %v150 = vpop.f32.mrf.mxu0
  %v151 = vadd.f32 0.0, %v150
  %152 = vmatmul.bf16.gmra.mxu0 %v76
  %v153 = vpop.f32.mrf.mxu0
  %v154 = vadd.f32 0.0, %v153
  %v155 = vpop.f32.mrf.mxu0
  %v156 = vadd.f32 0.0, %v155
  %157 = vmatmul.bf16.gmra.mxu0 %v77
  %v158 = vpop.f32.mrf.mxu0
  %v159 = vadd.f32 0.0, %v158
  %v160 = vpop.f32.mrf.mxu0
  %v161 = vadd.f32 0.0, %v160
  %162 = vmatmul.bf16.gmra.mxu0 %v78
  %v163 = vpop.f32.mrf.mxu0
  %v164 = vadd.f32 0.0, %v163
  %v165 = vpop.f32.mrf.mxu0
  %v166 = vadd.f32 0.0, %v165
  %167 = vmatmul.bf16.gmra.mxu0 %v79
  %v168 = vpop.f32.mrf.mxu0
  %v169 = vadd.f32 0.0, %v168
  %v170 = vpop.f32.mrf.mxu0
  %v171 = vadd.f32 0.0, %v170
  %172 = vmatmul.bf16.gmra.mxu0 %v80
  %v173 = vpop.f32.mrf.mxu0
  %v174 = vadd.f32 0.0, %v173
  %v175 = vpop.f32.mrf.mxu0
  %v176 = vadd.f32 0.0, %v175
  %177 = vmatmul.bf16.gmra.mxu0 %v81
  %v178 = vpop.f32.mrf.mxu0
  %v179 = vadd.f32 0.0, %v178
  %v180 = vpop.f32.mrf.mxu0
  %v181 = vadd.f32 0.0, %v180
  %182 = vmatmul.bf16.gmra.mxu0 %v82
  %v183 = vpop.f32.mrf.mxu0
  %v184 = vadd.f32 0.0, %v183
  %v185 = vpop.f32.mrf.mxu0
  %v186 = vadd.f32 0.0, %v185
  %187 = vdwg.mxu0
  %v188 = vpack.c.bf16 %v149, %v149
  %v189 = vpack.c.bf16 %v151, %v151
  %v190 = vpack.c.bf16 %v154, %v154
  %v191 = vpack.c.bf16 %v156, %v156
  %v192 = vpack.c.bf16 %v159, %v159
  %v193 = vpack.c.bf16 %v161, %v161
  %v194 = vpack.c.bf16 %v164, %v164
  %v195 = vpack.c.bf16 %v166, %v166
  %v196 = vpack.c.bf16 %v169, %v169
  %v197 = vpack.c.bf16 %v171, %v171
  %v198 = vpack.c.bf16 %v174, %v174
  %v199 = vpack.c.bf16 %v176, %v176
  %v200 = vpack.c.bf16 %v179, %v179
  %v201 = vpack.c.bf16 %v181, %v181
  %v202 = vpack.c.bf16 %v184, %v184
  %v203 = vpack.c.bf16 %v186, %v186
  %204 = vst [vmem:[%s2] sm:$0xf] %v188
  %205 = vst [vmem:[%s2 + $0x4] sm:$0xf] %v189
  %206 = vst [vmem:[%s2 + $0x8] sm:$0xf] %v190
  %207 = vst [vmem:[%s2 + $0xc] sm:$0xf] %v191
  %208 = vst [vmem:[%s2 + $0x10] sm:$0xf] %v192
  %209 = vst [vmem:[%s2 + $0x14] sm:$0xf] %v193
  %210 = vst [vmem:[%s2 + $0x18] sm:$0xf] %v194
  %211 = vst [vmem:[%s2 + $0x1c] sm:$0xf] %v195
  %212 = vst [vmem:[%s2 + $0x20] sm:$0xf] %v196
  %213 = vst [vmem:[%s2 + $0x24] sm:$0xf] %v197
  %214 = vst [vmem:[%s2 + $0x28] sm:$0xf] %v198
  %215 = vst [vmem:[%s2 + $0x2c] sm:$0xf] %v199
  %216 = vst [vmem:[%s2 + $0x30] sm:$0xf] %v200
  %217 = vst [vmem:[%s2 + $0x34] sm:$0xf] %v201
  %218 = vst [vmem:[%s2 + $0x38] sm:$0xf] %v202
  %219 = vst [vmem:[%s2 + $0x3c] sm:$0xf] %v203
  // Predicated region
  $region10: #{gcnmasker_forward.5} parent=0 // pred_check
    _
  $region11: #{gcnmasker_forward.5} parent=0 // pred_check_branch
    %221 = sbr.rel (0) target = $region13
  $region12: #{gcnmasker_forward.5} parent=0 // pred_region
    _
  $region13: #{gcnmasker_forward.5} parent=0 // pred_fallthru
    _
  // Predicated region
  $region14: #{gcnmasker_forward.5} parent=0 // pred_check
    _
  $region15: #{gcnmasker_forward.5} parent=0 // pred_check_branch
    %223 = sbr.rel (0) target = $region17
  $region16: #{gcnmasker_forward.5} parent=0 // pred_region
    _
  $region17: #{gcnmasker_forward.5} parent=0 // pred_fallthru
    _

// kernel: gcnmasker_forward.6
$region0: #{gcnmasker_forward.6}
  #allocation0 [shape = 'u32[]', space=smem, size = 0x4, offset = 0x4, fixed_abs, tag = 'smem constant byte address 0x4 - core index']
  #allocation1 [shape = 'u32[72,128]{1,0:T(1,128)}', space=vmem, size = 0x9000, scoped, tag = 'internal scratch']
  #allocation2 [shape = 'f32[128,128]{1,0:T(8,128)}', space=vmem, size = 0x10000, scoped, tag = 'scratch operand']
  %s0 = inlined_call_operand.vmem [shape: bf16[128,128], index: 0, kind: input, shape index: {}]
  %s1 = inlined_call_operand.vmem [shape: bf16[128,128], index: 1, kind: input, shape index: {}]
  %s2 = inlined_call_operand.vmem [shape: f32[1,128], index: 2, kind: input, shape index: {}]
  %s3 = inlined_call_operand.vmem [shape: f32[128,128], index: 3, kind: output, shape index: {}]
  %s4 = sld [smem:[#allocation0]]
  $region30: #{gcnmasker_forward.6} parent=0
    _
  %s6 = ssub.s32 1, %s4
  %s7 = scalar_select 0, %s6, %s4
  // Predicated region
  $region2: #{gcnmasker_forward.6} parent=0 // pred_check
    _
  $region3: #{gcnmasker_forward.6} parent=0 // pred_check_branch
    %9 = sbr.rel (0) target = $region5
  $region4: #{gcnmasker_forward.6} parent=0 // pred_region
    _
  $region5: #{gcnmasker_forward.6} parent=0 // pred_fallthru
    _
  // Predicated region
  $region6: #{gcnmasker_forward.6} parent=0 // pred_check
    _
  $region7: #{gcnmasker_forward.6} parent=0 // pred_check_branch
    %11 = sbr.rel (0) target = $region9
  $region8: #{gcnmasker_forward.6} parent=0 // pred_region
    _
  $region9: #{gcnmasker_forward.6} parent=0 // pred_fallthru
    _
  // Predicated region
  $region10: #{gcnmasker_forward.6} parent=0 // pred_check
    _
  $region11: #{gcnmasker_forward.6} parent=0 // pred_check_branch
    %13 = sbr.rel (0) target = $region13
  $region12: #{gcnmasker_forward.6} parent=0 // pred_region
    _
  $region13: #{gcnmasker_forward.6} parent=0 // pred_fallthru
    _
  %p14 = scmp.eq.s32.totalorder 0, 0
  // Predicated region
  $region14: #{gcnmasker_forward.6} parent=0 // pred_check
    %p15 = pneg %p14
  $region15: #{gcnmasker_forward.6} parent=0 // pred_check_branch
    %17 = sbr.rel (%p15) target = $region17
  $region16: #{gcnmasker_forward.6} parent=0 // pred_region
    %18 = vst [vmem:[#allocation2] sm:$0xff] 0.0
    %19 = vst [vmem:[#allocation2 + $0x8] sm:$0xff] 0.0
    %20 = vst [vmem:[#allocation2 + $0x10] sm:$0xff] 0.0
    %21 = vst [vmem:[#allocation2 + $0x18] sm:$0xff] 0.0
    %22 = vst [vmem:[#allocation2 + $0x20] sm:$0xff] 0.0
    %23 = vst [vmem:[#allocation2 + $0x28] sm:$0xff] 0.0
    %24 = vst [vmem:[#allocation2 + $0x30] sm:$0xff] 0.0
    %25 = vst [vmem:[#allocation2 + $0x38] sm:$0xff] 0.0
    %26 = vst [vmem:[#allocation2 + $0x40] sm:$0xff] 0.0
    %27 = vst [vmem:[#allocation2 + $0x48] sm:$0xff] 0.0
    %28 = vst [vmem:[#allocation2 + $0x50] sm:$0xff] 0.0
    %29 = vst [vmem:[#allocation2 + $0x58] sm:$0xff] 0.0
    %30 = vst [vmem:[#allocation2 + $0x60] sm:$0xff] 0.0
    %31 = vst [vmem:[#allocation2 + $0x68] sm:$0xff] 0.0
    %32 = vst [vmem:[#allocation2 + $0x70] sm:$0xff] 0.0
    %33 = vst [vmem:[#allocation2 + $0x78] sm:$0xff] 0.0
  $region17: #{gcnmasker_forward.6} parent=0 // pred_fallthru
    _
  %v34 = vld [vmem:[#allocation2] sm:$0xff]
  %v35 = vld [vmem:[#allocation2 + $0x8] sm:$0xff]
  %v36 = vld [vmem:[#allocation2 + $0x10] sm:$0xff]
  %v37 = vld [vmem:[#allocation2 + $0x18] sm:$0xff]
  %v38 = vld [vmem:[#allocation2 + $0x20] sm:$0xff]
  %v39 = vld [vmem:[#allocation2 + $0x28] sm:$0xff]
  %v40 = vld [vmem:[#allocation2 + $0x30] sm:$0xff]
  %v41 = vld [vmem:[#allocation2 + $0x38] sm:$0xff]
  %v42 = vld [vmem:[#allocation2 + $0x40] sm:$0xff]
  %v43 = vld [vmem:[#allocation2 + $0x48] sm:$0xff]
  %v44 = vld [vmem:[#allocation2 + $0x50] sm:$0xff]
  %v45 = vld [vmem:[#allocation2 + $0x58] sm:$0xff]
  %v46 = vld [vmem:[#allocation2 + $0x60] sm:$0xff]
  %v47 = vld [vmem:[#allocation2 + $0x68] sm:$0xff]
  %v48 = vld [vmem:[#allocation2 + $0x70] sm:$0xff]
  %v49 = vld [vmem:[#allocation2 + $0x78] sm:$0xff]
  %v50 = vld [vmem:[%s0] sm:$0xf]
  %v51 = vld [vmem:[%s0 + $0x4] sm:$0xf]
  %v52 = vld [vmem:[%s0 + $0x8] sm:$0xf]
  %v53 = vld [vmem:[%s0 + $0xc] sm:$0xf]
  %v54 = vld [vmem:[%s0 + $0x10] sm:$0xf]
  %v55 = vld [vmem:[%s0 + $0x14] sm:$0xf]
  %v56 = vld [vmem:[%s0 + $0x18] sm:$0xf]
  %v57 = vld [vmem:[%s0 + $0x1c] sm:$0xf]
  %v58 = vld [vmem:[%s0 + $0x20] sm:$0xf]
  %v59 = vld [vmem:[%s0 + $0x24] sm:$0xf]
  %v60 = vld [vmem:[%s0 + $0x28] sm:$0xf]
  %v61 = vld [vmem:[%s0 + $0x2c] sm:$0xf]
  %v62 = vld [vmem:[%s0 + $0x30] sm:$0xf]
  %v63 = vld [vmem:[%s0 + $0x34] sm:$0xf]
  %v64 = vld [vmem:[%s0 + $0x38] sm:$0xf]
  %v65 = vld [vmem:[%s0 + $0x3c] sm:$0xf]
  %v66 = vld [vmem:[%s1] sm:$0xf]
  %v67 = vld [vmem:[%s1 + $0x4] sm:$0xf]
  %v68 = vld [vmem:[%s1 + $0x8] sm:$0xf]
  %v69 = vld [vmem:[%s1 + $0xc] sm:$0xf]
  %v70 = vld [vmem:[%s1 + $0x10] sm:$0xf]
  %v71 = vld [vmem:[%s1 + $0x14] sm:$0xf]
  %v72 = vld [vmem:[%s1 + $0x18] sm:$0xf]
  %v73 = vld [vmem:[%s1 + $0x1c] sm:$0xf]
  %v74 = vld [vmem:[%s1 + $0x20] sm:$0xf]
  %v75 = vld [vmem:[%s1 + $0x24] sm:$0xf]
  %v76 = vld [vmem:[%s1 + $0x28] sm:$0xf]
  %v77 = vld [vmem:[%s1 + $0x2c] sm:$0xf]
  %v78 = vld [vmem:[%s1 + $0x30] sm:$0xf]
  %v79 = vld [vmem:[%s1 + $0x34] sm:$0xf]
  %v80 = vld [vmem:[%s1 + $0x38] sm:$0xf]
  %v81 = vld [vmem:[%s1 + $0x3c] sm:$0xf]
  %v98 = vunpack.c.l.b16 %v50
  %v99 = vunpack.c.l.b16 %v51
  %v100 = vunpack.c.l.b16 %v52
  %v101 = vunpack.c.l.b16 %v53
  %v102 = vunpack.c.l.b16 %v54
  %v103 = vunpack.c.l.b16 %v55
  %v104 = vunpack.c.l.b16 %v56
  %v105 = vunpack.c.l.b16 %v57
  %v106 = vunpack.c.l.b16 %v58
  %v107 = vunpack.c.l.b16 %v59
  %v108 = vunpack.c.l.b16 %v60
  %v109 = vunpack.c.l.b16 %v61
  %v110 = vunpack.c.l.b16 %v62
  %v111 = vunpack.c.l.b16 %v63
  %v112 = vunpack.c.l.b16 %v64
  %v113 = vunpack.c.l.b16 %v65
  %v114 = vpack.c.b16 %v99, %v98
  %v115 = vpack.c.b16 %v101, %v100
  %v116 = vpack.c.b16 %v103, %v102
  %v117 = vpack.c.b16 %v105, %v104
  %v118 = vpack.c.b16 %v107, %v106
  %v119 = vpack.c.b16 %v109, %v108
  %v120 = vpack.c.b16 %v111, %v110
  %v121 = vpack.c.b16 %v113, %v112
  %v146 = vunpack.c.l.b16 %v66
  %v147 = vunpack.c.l.b16 %v67
  %v148 = vunpack.c.l.b16 %v68
  %v149 = vunpack.c.l.b16 %v69
  %v150 = vunpack.c.l.b16 %v70
  %v151 = vunpack.c.l.b16 %v71
  %v152 = vunpack.c.l.b16 %v72
  %v153 = vunpack.c.l.b16 %v73
  %v154 = vunpack.c.l.b16 %v74
  %v155 = vunpack.c.l.b16 %v75
  %v156 = vunpack.c.l.b16 %v76
  %v157 = vunpack.c.l.b16 %v77
  %v158 = vunpack.c.l.b16 %v78
  %v159 = vunpack.c.l.b16 %v79
  %v160 = vunpack.c.l.b16 %v80
  %v161 = vunpack.c.l.b16 %v81
  %v162 = vpack.c.b16 %v147, %v146
  %v163 = vpack.c.b16 %v149, %v148
  %v164 = vpack.c.b16 %v151, %v150
  %v165 = vpack.c.b16 %v153, %v152
  %v166 = vpack.c.b16 %v155, %v154
  %v167 = vpack.c.b16 %v157, %v156
  %v168 = vpack.c.b16 %v159, %v158
  %v169 = vpack.c.b16 %v161, %v160
  %178 = vmatpush.bf16.msra.mxu0 %v169
  %179 = vmatpush.bf16.msra.mxu0 %v168
  %180 = vmatpush.bf16.msra.mxu0 %v167
  %181 = vmatpush.bf16.msra.mxu0 %v166
  %182 = vmatpush.bf16.msra.mxu0 %v165
  %183 = vmatpush.bf16.msra.mxu0 %v164
  %184 = vmatpush.bf16.msra.mxu0 %v163
  %185 = vmatpush.bf16.msra.mxu0 %v162
  %186 = vmatmul.bf16.gmra.mxu0 %v114
  %v187 = vpop.f32.mrf.mxu0
  %v188 = vadd.f32 0.0, %v187
  %v189 = vpop.f32.mrf.mxu0
  %v190 = vadd.f32 0.0, %v189
  %191 = vmatmul.bf16.gmra.mxu0 %v115
  %v192 = vpop.f32.mrf.mxu0
  %v193 = vadd.f32 0.0, %v192
  %v194 = vpop.f32.mrf.mxu0
  %v195 = vadd.f32 0.0, %v194
  %196 = vmatmul.bf16.gmra.mxu0 %v116
  %v197 = vpop.f32.mrf.mxu0
  %v198 = vadd.f32 0.0, %v197
  %v199 = vpop.f32.mrf.mxu0
  %v200 = vadd.f32 0.0, %v199
  %201 = vmatmul.bf16.gmra.mxu0 %v117
  %v202 = vpop.f32.mrf.mxu0
  %v203 = vadd.f32 0.0, %v202
  %v204 = vpop.f32.mrf.mxu0
  %v205 = vadd.f32 0.0, %v204
  %206 = vmatmul.bf16.gmra.mxu0 %v118
  %v207 = vpop.f32.mrf.mxu0
  %v208 = vadd.f32 0.0, %v207
  %v209 = vpop.f32.mrf.mxu0
  %v210 = vadd.f32 0.0, %v209
  %211 = vmatmul.bf16.gmra.mxu0 %v119
  %v212 = vpop.f32.mrf.mxu0
  %v213 = vadd.f32 0.0, %v212
  %v214 = vpop.f32.mrf.mxu0
  %v215 = vadd.f32 0.0, %v214
  %216 = vmatmul.bf16.gmra.mxu0 %v120
  %v217 = vpop.f32.mrf.mxu0
  %v218 = vadd.f32 0.0, %v217
  %v219 = vpop.f32.mrf.mxu0
  %v220 = vadd.f32 0.0, %v219
  %221 = vmatmul.bf16.gmra.mxu0 %v121
  %v222 = vpop.f32.mrf.mxu0
  %v223 = vadd.f32 0.0, %v222
  %v224 = vpop.f32.mrf.mxu0
  %v225 = vadd.f32 0.0, %v224
  %226 = vdwg.mxu0
  %v227 = vadd.f32 %v34, %v188
  %v228 = vadd.f32 %v35, %v190
  %v229 = vadd.f32 %v36, %v193
  %v230 = vadd.f32 %v37, %v195
  %v231 = vadd.f32 %v38, %v198
  %v232 = vadd.f32 %v39, %v200
  %v233 = vadd.f32 %v40, %v203
  %v234 = vadd.f32 %v41, %v205
  %v235 = vadd.f32 %v42, %v208
  %v236 = vadd.f32 %v43, %v210
  %v237 = vadd.f32 %v44, %v213
  %v238 = vadd.f32 %v45, %v215
  %v239 = vadd.f32 %v46, %v218
  %v240 = vadd.f32 %v47, %v220
  %v241 = vadd.f32 %v48, %v223
  %v242 = vadd.f32 %v49, %v225
  %243 = vst [vmem:[#allocation2] sm:$0xff] %v227
  %244 = vst [vmem:[#allocation2 + $0x8] sm:$0xff] %v228
  %245 = vst [vmem:[#allocation2 + $0x10] sm:$0xff] %v229
  %246 = vst [vmem:[#allocation2 + $0x18] sm:$0xff] %v230
  %247 = vst [vmem:[#allocation2 + $0x20] sm:$0xff] %v231
  %248 = vst [vmem:[#allocation2 + $0x28] sm:$0xff] %v232
  %249 = vst [vmem:[#allocation2 + $0x30] sm:$0xff] %v233
  %250 = vst [vmem:[#allocation2 + $0x38] sm:$0xff] %v234
  %251 = vst [vmem:[#allocation2 + $0x40] sm:$0xff] %v235
  %252 = vst [vmem:[#allocation2 + $0x48] sm:$0xff] %v236
  %253 = vst [vmem:[#allocation2 + $0x50] sm:$0xff] %v237
  %254 = vst [vmem:[#allocation2 + $0x58] sm:$0xff] %v238
  %255 = vst [vmem:[#allocation2 + $0x60] sm:$0xff] %v239
  %256 = vst [vmem:[#allocation2 + $0x68] sm:$0xff] %v240
  %257 = vst [vmem:[#allocation2 + $0x70] sm:$0xff] %v241
  %258 = vst [vmem:[#allocation2 + $0x78] sm:$0xff] %v242
  // Predicated region
  $region18: #{gcnmasker_forward.6} parent=0 // pred_check
    %p259 = pneg %p14
  $region19: #{gcnmasker_forward.6} parent=0 // pred_check_branch
    %261 = sbr.rel (%p259) target = $region21
  $region20: #{gcnmasker_forward.6} parent=0 // pred_region
    %v262 = vld [vmem:[#allocation2] sm:$0xff]
    %v263 = vld [vmem:[#allocation2 + $0x8] sm:$0xff]
    %v264 = vld [vmem:[#allocation2 + $0x10] sm:$0xff]
    %v265 = vld [vmem:[#allocation2 + $0x18] sm:$0xff]
    %v266 = vld [vmem:[#allocation2 + $0x20] sm:$0xff]
    %v267 = vld [vmem:[#allocation2 + $0x28] sm:$0xff]
    %v268 = vld [vmem:[#allocation2 + $0x30] sm:$0xff]
    %v269 = vld [vmem:[#allocation2 + $0x38] sm:$0xff]
    %v270 = vld [vmem:[#allocation2 + $0x40] sm:$0xff]
    %v271 = vld [vmem:[#allocation2 + $0x48] sm:$0xff]
    %v272 = vld [vmem:[#allocation2 + $0x50] sm:$0xff]
    %v273 = vld [vmem:[#allocation2 + $0x58] sm:$0xff]
    %v274 = vld [vmem:[#allocation2 + $0x60] sm:$0xff]
    %v275 = vld [vmem:[#allocation2 + $0x68] sm:$0xff]
    %v276 = vld [vmem:[#allocation2 + $0x70] sm:$0xff]
    %v277 = vld [vmem:[#allocation2 + $0x78] sm:$0xff]
    %v278 = vld [vmem:[%s2] sm:$0x1]
    %v280 = vperm.slane %v278, 0
    %v282 = vadd.f32 %v262, %v280
    %v283 = vadd.f32 %v263, %v280
    %v284 = vadd.f32 %v264, %v280
    %v285 = vadd.f32 %v265, %v280
    %v286 = vadd.f32 %v266, %v280
    %v287 = vadd.f32 %v267, %v280
    %v288 = vadd.f32 %v268, %v280
    %v289 = vadd.f32 %v269, %v280
    %v290 = vadd.f32 %v270, %v280
    %v291 = vadd.f32 %v271, %v280
    %v292 = vadd.f32 %v272, %v280
    %v293 = vadd.f32 %v273, %v280
    %v294 = vadd.f32 %v274, %v280
    %v295 = vadd.f32 %v275, %v280
    %v296 = vadd.f32 %v276, %v280
    %v297 = vadd.f32 %v277, %v280
    %v298 = vmax.f32 %v282, 0.0
    %v299 = vmax.f32 %v283, 0.0
    %v300 = vmax.f32 %v284, 0.0
    %v301 = vmax.f32 %v285, 0.0
    %v302 = vmax.f32 %v286, 0.0
    %v303 = vmax.f32 %v287, 0.0
    %v304 = vmax.f32 %v288, 0.0
    %v305 = vmax.f32 %v289, 0.0
    %v306 = vmax.f32 %v290, 0.0
    %v307 = vmax.f32 %v291, 0.0
    %v308 = vmax.f32 %v292, 0.0
    %v309 = vmax.f32 %v293, 0.0
    %v310 = vmax.f32 %v294, 0.0
    %v311 = vmax.f32 %v295, 0.0
    %v312 = vmax.f32 %v296, 0.0
    %v313 = vmax.f32 %v297, 0.0
    %314 = vst [vmem:[%s3] sm:$0xff] %v298
    %315 = vst [vmem:[%s3 + $0x8] sm:$0xff] %v299
    %316 = vst [vmem:[%s3 + $0x10] sm:$0xff] %v300
    %317 = vst [vmem:[%s3 + $0x18] sm:$0xff] %v301
    %318 = vst [vmem:[%s3 + $0x20] sm:$0xff] %v302
    %319 = vst [vmem:[%s3 + $0x28] sm:$0xff] %v303
    %320 = vst [vmem:[%s3 + $0x30] sm:$0xff] %v304
    %321 = vst [vmem:[%s3 + $0x38] sm:$0xff] %v305
    %322 = vst [vmem:[%s3 + $0x40] sm:$0xff] %v306
    %323 = vst [vmem:[%s3 + $0x48] sm:$0xff] %v307
    %324 = vst [vmem:[%s3 + $0x50] sm:$0xff] %v308
    %325 = vst [vmem:[%s3 + $0x58] sm:$0xff] %v309
    %326 = vst [vmem:[%s3 + $0x60] sm:$0xff] %v310
    %327 = vst [vmem:[%s3 + $0x68] sm:$0xff] %v311
    %328 = vst [vmem:[%s3 + $0x70] sm:$0xff] %v312
    %329 = vst [vmem:[%s3 + $0x78] sm:$0xff] %v313
  $region21: #{gcnmasker_forward.6} parent=0 // pred_fallthru
    _
  // Predicated region
  $region22: #{gcnmasker_forward.6} parent=0 // pred_check
    _
  $region23: #{gcnmasker_forward.6} parent=0 // pred_check_branch
    %331 = sbr.rel (0) target = $region25
  $region24: #{gcnmasker_forward.6} parent=0 // pred_region
    _
  $region25: #{gcnmasker_forward.6} parent=0 // pred_fallthru
    _
  // Predicated region
  $region26: #{gcnmasker_forward.6} parent=0 // pred_check
    _
  $region27: #{gcnmasker_forward.6} parent=0 // pred_check_branch
    %333 = sbr.rel (0) target = $region29
  $region28: #{gcnmasker_forward.6} parent=0 // pred_region
    _
  $region29: #{gcnmasker_forward.6} parent=0 // pred_fallthru
    _

// kernel: gcnmasker_forward.8
$region0: #{gcnmasker_forward.8}
  #allocation0 [shape = 'u32[]', space=smem, size = 0x4, offset = 0x4, fixed_abs, tag = 'smem constant byte address 0x4 - core index']
  #allocation1 [shape = 'u32[72,128]{1,0:T(1,128)}', space=vmem, size = 0x9000, scoped, tag = 'internal scratch']
  #allocation2 [shape = 'f32[128,128]{1,0:T(8,128)}', space=vmem, size = 0x10000, scoped, tag = 'scratch operand']
  %s0 = inlined_call_operand.vmem [shape: bf16[128,128], index: 0, kind: input, shape index: {}]
  %s1 = inlined_call_operand.vmem [shape: bf16[128,128], index: 1, kind: input, shape index: {}]
  %s2 = inlined_call_operand.vmem [shape: f32[1,128], index: 2, kind: input, shape index: {}]
  %s3 = inlined_call_operand.vmem [shape: f32[128,128], index: 3, kind: output, shape index: {}]
  %s4 = sld [smem:[#allocation0]]
  $region30: #{gcnmasker_forward.8} parent=0
    _
  %s6 = ssub.s32 1, %s4
  %s7 = scalar_select 0, %s6, %s4
  // Predicated region
  $region2: #{gcnmasker_forward.8} parent=0 // pred_check
    _
  $region3: #{gcnmasker_forward.8} parent=0 // pred_check_branch
    %9 = sbr.rel (0) target = $region5
  $region4: #{gcnmasker_forward.8} parent=0 // pred_region
    _
  $region5: #{gcnmasker_forward.8} parent=0 // pred_fallthru
    _
  // Predicated region
  $region6: #{gcnmasker_forward.8} parent=0 // pred_check
    _
  $region7: #{gcnmasker_forward.8} parent=0 // pred_check_branch
    %11 = sbr.rel (0) target = $region9
  $region8: #{gcnmasker_forward.8} parent=0 // pred_region
    _
  $region9: #{gcnmasker_forward.8} parent=0 // pred_fallthru
    _
  // Predicated region
  $region10: #{gcnmasker_forward.8} parent=0 // pred_check
    _
  $region11: #{gcnmasker_forward.8} parent=0 // pred_check_branch
    %13 = sbr.rel (0) target = $region13
  $region12: #{gcnmasker_forward.8} parent=0 // pred_region
    _
  $region13: #{gcnmasker_forward.8} parent=0 // pred_fallthru
    _
  %p14 = scmp.eq.s32.totalorder 0, 0
  // Predicated region
  $region14: #{gcnmasker_forward.8} parent=0 // pred_check
    %p15 = pneg %p14
  $region15: #{gcnmasker_forward.8} parent=0 // pred_check_branch
    %17 = sbr.rel (%p15) target = $region17
  $region16: #{gcnmasker_forward.8} parent=0 // pred_region
    %18 = vst [vmem:[#allocation2] sm:$0xff] 0.0
    %19 = vst [vmem:[#allocation2 + $0x8] sm:$0xff] 0.0
    %20 = vst [vmem:[#allocation2 + $0x10] sm:$0xff] 0.0
    %21 = vst [vmem:[#allocation2 + $0x18] sm:$0xff] 0.0
    %22 = vst [vmem:[#allocation2 + $0x20] sm:$0xff] 0.0
    %23 = vst [vmem:[#allocation2 + $0x28] sm:$0xff] 0.0
    %24 = vst [vmem:[#allocation2 + $0x30] sm:$0xff] 0.0
    %25 = vst [vmem:[#allocation2 + $0x38] sm:$0xff] 0.0
    %26 = vst [vmem:[#allocation2 + $0x40] sm:$0xff] 0.0
    %27 = vst [vmem:[#allocation2 + $0x48] sm:$0xff] 0.0
    %28 = vst [vmem:[#allocation2 + $0x50] sm:$0xff] 0.0
    %29 = vst [vmem:[#allocation2 + $0x58] sm:$0xff] 0.0
    %30 = vst [vmem:[#allocation2 + $0x60] sm:$0xff] 0.0
    %31 = vst [vmem:[#allocation2 + $0x68] sm:$0xff] 0.0
    %32 = vst [vmem:[#allocation2 + $0x70] sm:$0xff] 0.0
    %33 = vst [vmem:[#allocation2 + $0x78] sm:$0xff] 0.0
  $region17: #{gcnmasker_forward.8} parent=0 // pred_fallthru
    _
  %v34 = vld [vmem:[#allocation2] sm:$0xff]
  %v35 = vld [vmem:[#allocation2 + $0x8] sm:$0xff]
  %v36 = vld [vmem:[#allocation2 + $0x10] sm:$0xff]
  %v37 = vld [vmem:[#allocation2 + $0x18] sm:$0xff]
  %v38 = vld [vmem:[#allocation2 + $0x20] sm:$0xff]
  %v39 = vld [vmem:[#allocation2 + $0x28] sm:$0xff]
  %v40 = vld [vmem:[#allocation2 + $0x30] sm:$0xff]
  %v41 = vld [vmem:[#allocation2 + $0x38] sm:$0xff]
  %v42 = vld [vmem:[#allocation2 + $0x40] sm:$0xff]
  %v43 = vld [vmem:[#allocation2 + $0x48] sm:$0xff]
  %v44 = vld [vmem:[#allocation2 + $0x50] sm:$0xff]
  %v45 = vld [vmem:[#allocation2 + $0x58] sm:$0xff]
  %v46 = vld [vmem:[#allocation2 + $0x60] sm:$0xff]
  %v47 = vld [vmem:[#allocation2 + $0x68] sm:$0xff]
  %v48 = vld [vmem:[#allocation2 + $0x70] sm:$0xff]
  %v49 = vld [vmem:[#allocation2 + $0x78] sm:$0xff]
  %v50 = vld [vmem:[%s0] sm:$0xf]
  %v51 = vld [vmem:[%s0 + $0x4] sm:$0xf]
  %v52 = vld [vmem:[%s0 + $0x8] sm:$0xf]
  %v53 = vld [vmem:[%s0 + $0xc] sm:$0xf]
  %v54 = vld [vmem:[%s0 + $0x10] sm:$0xf]
  %v55 = vld [vmem:[%s0 + $0x14] sm:$0xf]
  %v56 = vld [vmem:[%s0 + $0x18] sm:$0xf]
  %v57 = vld [vmem:[%s0 + $0x1c] sm:$0xf]
  %v58 = vld [vmem:[%s0 + $0x20] sm:$0xf]
  %v59 = vld [vmem:[%s0 + $0x24] sm:$0xf]
  %v60 = vld [vmem:[%s0 + $0x28] sm:$0xf]
  %v61 = vld [vmem:[%s0 + $0x2c] sm:$0xf]
  %v62 = vld [vmem:[%s0 + $0x30] sm:$0xf]
  %v63 = vld [vmem:[%s0 + $0x34] sm:$0xf]
  %v64 = vld [vmem:[%s0 + $0x38] sm:$0xf]
  %v65 = vld [vmem:[%s0 + $0x3c] sm:$0xf]
  %v66 = vld [vmem:[%s1] sm:$0xf]
  %v67 = vld [vmem:[%s1 + $0x4] sm:$0xf]
  %v68 = vld [vmem:[%s1 + $0x8] sm:$0xf]
  %v69 = vld [vmem:[%s1 + $0xc] sm:$0xf]
  %v70 = vld [vmem:[%s1 + $0x10] sm:$0xf]
  %v71 = vld [vmem:[%s1 + $0x14] sm:$0xf]
  %v72 = vld [vmem:[%s1 + $0x18] sm:$0xf]
  %v73 = vld [vmem:[%s1 + $0x1c] sm:$0xf]
  %v74 = vld [vmem:[%s1 + $0x20] sm:$0xf]
  %v75 = vld [vmem:[%s1 + $0x24] sm:$0xf]
  %v76 = vld [vmem:[%s1 + $0x28] sm:$0xf]
  %v77 = vld [vmem:[%s1 + $0x2c] sm:$0xf]
  %v78 = vld [vmem:[%s1 + $0x30] sm:$0xf]
  %v79 = vld [vmem:[%s1 + $0x34] sm:$0xf]
  %v80 = vld [vmem:[%s1 + $0x38] sm:$0xf]
  %v81 = vld [vmem:[%s1 + $0x3c] sm:$0xf]
  %v98 = vunpack.c.l.b16 %v50
  %v99 = vunpack.c.l.b16 %v51
  %v100 = vunpack.c.l.b16 %v52
  %v101 = vunpack.c.l.b16 %v53
  %v102 = vunpack.c.l.b16 %v54
  %v103 = vunpack.c.l.b16 %v55
  %v104 = vunpack.c.l.b16 %v56
  %v105 = vunpack.c.l.b16 %v57
  %v106 = vunpack.c.l.b16 %v58
  %v107 = vunpack.c.l.b16 %v59
  %v108 = vunpack.c.l.b16 %v60
  %v109 = vunpack.c.l.b16 %v61
  %v110 = vunpack.c.l.b16 %v62
  %v111 = vunpack.c.l.b16 %v63
  %v112 = vunpack.c.l.b16 %v64
  %v113 = vunpack.c.l.b16 %v65
  %v114 = vpack.c.b16 %v99, %v98
  %v115 = vpack.c.b16 %v101, %v100
  %v116 = vpack.c.b16 %v103, %v102
  %v117 = vpack.c.b16 %v105, %v104
  %v118 = vpack.c.b16 %v107, %v106
  %v119 = vpack.c.b16 %v109, %v108
  %v120 = vpack.c.b16 %v111, %v110
  %v121 = vpack.c.b16 %v113, %v112
  %v146 = vunpack.c.l.b16 %v66
  %v147 = vunpack.c.l.b16 %v67
  %v148 = vunpack.c.l.b16 %v68
  %v149 = vunpack.c.l.b16 %v69
  %v150 = vunpack.c.l.b16 %v70
  %v151 = vunpack.c.l.b16 %v71
  %v152 = vunpack.c.l.b16 %v72
  %v153 = vunpack.c.l.b16 %v73
  %v154 = vunpack.c.l.b16 %v74
  %v155 = vunpack.c.l.b16 %v75
  %v156 = vunpack.c.l.b16 %v76
  %v157 = vunpack.c.l.b16 %v77
  %v158 = vunpack.c.l.b16 %v78
  %v159 = vunpack.c.l.b16 %v79
  %v160 = vunpack.c.l.b16 %v80
  %v161 = vunpack.c.l.b16 %v81
  %v162 = vpack.c.b16 %v147, %v146
  %v163 = vpack.c.b16 %v149, %v148
  %v164 = vpack.c.b16 %v151, %v150
  %v165 = vpack.c.b16 %v153, %v152
  %v166 = vpack.c.b16 %v155, %v154
  %v167 = vpack.c.b16 %v157, %v156
  %v168 = vpack.c.b16 %v159, %v158
  %v169 = vpack.c.b16 %v161, %v160
  %178 = vmatpush.bf16.msra.mxu0 %v169
  %179 = vmatpush.bf16.msra.mxu0 %v168
  %180 = vmatpush.bf16.msra.mxu0 %v167
  %181 = vmatpush.bf16.msra.mxu0 %v166
  %182 = vmatpush.bf16.msra.mxu0 %v165
  %183 = vmatpush.bf16.msra.mxu0 %v164
  %184 = vmatpush.bf16.msra.mxu0 %v163
  %185 = vmatpush.bf16.msra.mxu0 %v162
  %186 = vmatmul.bf16.gmra.mxu0 %v114
  %v187 = vpop.f32.mrf.mxu0
  %v188 = vadd.f32 0.0, %v187
  %v189 = vpop.f32.mrf.mxu0
  %v190 = vadd.f32 0.0, %v189
  %191 = vmatmul.bf16.gmra.mxu0 %v115
  %v192 = vpop.f32.mrf.mxu0
  %v193 = vadd.f32 0.0, %v192
  %v194 = vpop.f32.mrf.mxu0
  %v195 = vadd.f32 0.0, %v194
  %196 = vmatmul.bf16.gmra.mxu0 %v116
  %v197 = vpop.f32.mrf.mxu0
  %v198 = vadd.f32 0.0, %v197
  %v199 = vpop.f32.mrf.mxu0
  %v200 = vadd.f32 0.0, %v199
  %201 = vmatmul.bf16.gmra.mxu0 %v117
  %v202 = vpop.f32.mrf.mxu0
  %v203 = vadd.f32 0.0, %v202
  %v204 = vpop.f32.mrf.mxu0
  %v205 = vadd.f32 0.0, %v204
  %206 = vmatmul.bf16.gmra.mxu0 %v118
  %v207 = vpop.f32.mrf.mxu0
  %v208 = vadd.f32 0.0, %v207
  %v209 = vpop.f32.mrf.mxu0
  %v210 = vadd.f32 0.0, %v209
  %211 = vmatmul.bf16.gmra.mxu0 %v119
  %v212 = vpop.f32.mrf.mxu0
  %v213 = vadd.f32 0.0, %v212
  %v214 = vpop.f32.mrf.mxu0
  %v215 = vadd.f32 0.0, %v214
  %216 = vmatmul.bf16.gmra.mxu0 %v120
  %v217 = vpop.f32.mrf.mxu0
  %v218 = vadd.f32 0.0, %v217
  %v219 = vpop.f32.mrf.mxu0
  %v220 = vadd.f32 0.0, %v219
  %221 = vmatmul.bf16.gmra.mxu0 %v121
  %v222 = vpop.f32.mrf.mxu0
  %v223 = vadd.f32 0.0, %v222
  %v224 = vpop.f32.mrf.mxu0
  %v225 = vadd.f32 0.0, %v224
  %226 = vdwg.mxu0
  %v227 = vadd.f32 %v34, %v188
  %v228 = vadd.f32 %v35, %v190
  %v229 = vadd.f32 %v36, %v193
  %v230 = vadd.f32 %v37, %v195
  %v231 = vadd.f32 %v38, %v198
  %v232 = vadd.f32 %v39, %v200
  %v233 = vadd.f32 %v40, %v203
  %v234 = vadd.f32 %v41, %v205
  %v235 = vadd.f32 %v42, %v208
  %v236 = vadd.f32 %v43, %v210
  %v237 = vadd.f32 %v44, %v213
  %v238 = vadd.f32 %v45, %v215
  %v239 = vadd.f32 %v46, %v218
  %v240 = vadd.f32 %v47, %v220
  %v241 = vadd.f32 %v48, %v223
  %v242 = vadd.f32 %v49, %v225
  %243 = vst [vmem:[#allocation2] sm:$0xff] %v227
  %244 = vst [vmem:[#allocation2 + $0x8] sm:$0xff] %v228
  %245 = vst [vmem:[#allocation2 + $0x10] sm:$0xff] %v229
  %246 = vst [vmem:[#allocation2 + $0x18] sm:$0xff] %v230
  %247 = vst [vmem:[#allocation2 + $0x20] sm:$0xff] %v231
  %248 = vst [vmem:[#allocation2 + $0x28] sm:$0xff] %v232
  %249 = vst [vmem:[#allocation2 + $0x30] sm:$0xff] %v233
  %250 = vst [vmem:[#allocation2 + $0x38] sm:$0xff] %v234
  %251 = vst [vmem:[#allocation2 + $0x40] sm:$0xff] %v235
  %252 = vst [vmem:[#allocation2 + $0x48] sm:$0xff] %v236
  %253 = vst [vmem:[#allocation2 + $0x50] sm:$0xff] %v237
  %254 = vst [vmem:[#allocation2 + $0x58] sm:$0xff] %v238
  %255 = vst [vmem:[#allocation2 + $0x60] sm:$0xff] %v239
  %256 = vst [vmem:[#allocation2 + $0x68] sm:$0xff] %v240
  %257 = vst [vmem:[#allocation2 + $0x70] sm:$0xff] %v241
  %258 = vst [vmem:[#allocation2 + $0x78] sm:$0xff] %v242
  // Predicated region
  $region18: #{gcnmasker_forward.8} parent=0 // pred_check
    %p259 = pneg %p14
  $region19: #{gcnmasker_forward.8} parent=0 // pred_check_branch
    %261 = sbr.rel (%p259) target = $region21
  $region20: #{gcnmasker_forward.8} parent=0 // pred_region
    %v262 = vld [vmem:[#allocation2] sm:$0xff]
    %v263 = vld [vmem:[#allocation2 + $0x8] sm:$0xff]
    %v264 = vld [vmem:[#allocation2 + $0x10] sm:$0xff]
    %v265 = vld [vmem:[#allocation2 + $0x18] sm:$0xff]
    %v266 = vld [vmem:[#allocation2 + $0x20] sm:$0xff]
    %v267 = vld [vmem:[#allocation2 + $0x28] sm:$0xff]
    %v268 = vld [vmem:[#allocation2 + $0x30] sm:$0xff]
    %v269 = vld [vmem:[#allocation2 + $0x38] sm:$0xff]
    %v270 = vld [vmem:[#allocation2 + $0x40] sm:$0xff]
    %v271 = vld [vmem:[#allocation2 + $0x48] sm:$0xff]
    %v272 = vld [vmem:[#allocation2 + $0x50] sm:$0xff]
    %v273 = vld [vmem:[#allocation2 + $0x58] sm:$0xff]
    %v274 = vld [vmem:[#allocation2 + $0x60] sm:$0xff]
    %v275 = vld [vmem:[#allocation2 + $0x68] sm:$0xff]
    %v276 = vld [vmem:[#allocation2 + $0x70] sm:$0xff]
    %v277 = vld [vmem:[#allocation2 + $0x78] sm:$0xff]
    %v278 = vld [vmem:[%s2] sm:$0x1]
    %v280 = vperm.slane %v278, 0
    %v282 = vadd.f32 %v262, %v280
    %v283 = vadd.f32 %v263, %v280
    %v284 = vadd.f32 %v264, %v280
    %v285 = vadd.f32 %v265, %v280
    %v286 = vadd.f32 %v266, %v280
    %v287 = vadd.f32 %v267, %v280
    %v288 = vadd.f32 %v268, %v280
    %v289 = vadd.f32 %v269, %v280
    %v290 = vadd.f32 %v270, %v280
    %v291 = vadd.f32 %v271, %v280
    %v292 = vadd.f32 %v272, %v280
    %v293 = vadd.f32 %v273, %v280
    %v294 = vadd.f32 %v274, %v280
    %v295 = vadd.f32 %v275, %v280
    %v296 = vadd.f32 %v276, %v280
    %v297 = vadd.f32 %v277, %v280
    %298 = vst [vmem:[%s3] sm:$0xff] %v282
    %299 = vst [vmem:[%s3 + $0x8] sm:$0xff] %v283
    %300 = vst [vmem:[%s3 + $0x10] sm:$0xff] %v284
    %301 = vst [vmem:[%s3 + $0x18] sm:$0xff] %v285
    %302 = vst [vmem:[%s3 + $0x20] sm:$0xff] %v286
    %303 = vst [vmem:[%s3 + $0x28] sm:$0xff] %v287
    %304 = vst [vmem:[%s3 + $0x30] sm:$0xff] %v288
    %305 = vst [vmem:[%s3 + $0x38] sm:$0xff] %v289
    %306 = vst [vmem:[%s3 + $0x40] sm:$0xff] %v290
    %307 = vst [vmem:[%s3 + $0x48] sm:$0xff] %v291
    %308 = vst [vmem:[%s3 + $0x50] sm:$0xff] %v292
    %309 = vst [vmem:[%s3 + $0x58] sm:$0xff] %v293
    %310 = vst [vmem:[%s3 + $0x60] sm:$0xff] %v294
    %311 = vst [vmem:[%s3 + $0x68] sm:$0xff] %v295
    %312 = vst [vmem:[%s3 + $0x70] sm:$0xff] %v296
    %313 = vst [vmem:[%s3 + $0x78] sm:$0xff] %v297
  $region21: #{gcnmasker_forward.8} parent=0 // pred_fallthru
    _
  // Predicated region
  $region22: #{gcnmasker_forward.8} parent=0 // pred_check
    _
  $region23: #{gcnmasker_forward.8} parent=0 // pred_check_branch
    %315 = sbr.rel (0) target = $region25
  $region24: #{gcnmasker_forward.8} parent=0 // pred_region
    _
  $region25: #{gcnmasker_forward.8} parent=0 // pred_fallthru
    _
  // Predicated region
  $region26: #{gcnmasker_forward.8} parent=0 // pred_check
    _
  $region27: #{gcnmasker_forward.8} parent=0 // pred_check_branch
    %317 = sbr.rel (0) target = $region29
  $region28: #{gcnmasker_forward.8} parent=0 // pred_region
    _
  $region29: #{gcnmasker_forward.8} parent=0 // pred_fallthru
    _

// kernel: gcnmasker_forward.9
$region0: #{gcnmasker_forward.9}
  #allocation0 [shape = 'u32[]', space=smem, size = 0x4, offset = 0x4, fixed_abs, tag = 'smem constant byte address 0x4 - core index']
  #allocation1 [shape = 'u32[72,128]{1,0:T(1,128)}', space=vmem, size = 0x9000, scoped, tag = 'internal scratch']
  %s0 = inlined_call_operand.vmem [shape: s32[2,128], index: 0, kind: input, shape index: {}]
  %s1 = inlined_call_operand.vmem [shape: f32[128,128], index: 1, kind: input, shape index: {}]
  %s2 = inlined_call_operand.vmem [shape: f32[1,128], index: 2, kind: output, shape index: {}]
  %s3 = sld [smem:[#allocation0]]
  $region18: #{gcnmasker_forward.9} parent=0
    _
  %s5 = ssub.s32 1, %s3
  %s6 = scalar_select 0, %s5, %s3
  // Predicated region
  $region2: #{gcnmasker_forward.9} parent=0 // pred_check
    _
  $region3: #{gcnmasker_forward.9} parent=0 // pred_check_branch
    %8 = sbr.rel (0) target = $region5
  $region4: #{gcnmasker_forward.9} parent=0 // pred_region
    _
  $region5: #{gcnmasker_forward.9} parent=0 // pred_fallthru
    _
  // Predicated region
  $region6: #{gcnmasker_forward.9} parent=0 // pred_check
    _
  $region7: #{gcnmasker_forward.9} parent=0 // pred_check_branch
    %10 = sbr.rel (0) target = $region9
  $region8: #{gcnmasker_forward.9} parent=0 // pred_region
    _
  $region9: #{gcnmasker_forward.9} parent=0 // pred_fallthru
    _
  %v11 = vld [vmem:[%s1] sm:$0xff]
  %v12 = vld [vmem:[%s1 + $0x8] sm:$0xff]
  %v13 = vld [vmem:[%s1 + $0x10] sm:$0xff]
  %v14 = vld [vmem:[%s1 + $0x18] sm:$0xff]
  %v15 = vld [vmem:[%s1 + $0x20] sm:$0xff]
  %v16 = vld [vmem:[%s1 + $0x28] sm:$0xff]
  %v17 = vld [vmem:[%s1 + $0x30] sm:$0xff]
  %v18 = vld [vmem:[%s1 + $0x38] sm:$0xff]
  %v19 = vld [vmem:[%s1 + $0x40] sm:$0xff]
  %v20 = vld [vmem:[%s1 + $0x48] sm:$0xff]
  %v21 = vld [vmem:[%s1 + $0x50] sm:$0xff]
  %v22 = vld [vmem:[%s1 + $0x58] sm:$0xff]
  %v23 = vld [vmem:[%s1 + $0x60] sm:$0xff]
  %v24 = vld [vmem:[%s1 + $0x68] sm:$0xff]
  %v25 = vld [vmem:[%s1 + $0x70] sm:$0xff]
  %v26 = vld [vmem:[%s1 + $0x78] sm:$0xff]
  %v27 = vld [vmem:[%s0] sm:$0x1]
  %v28 = vlaneseq
  %v29 = vshrl.u32 %v28, 7
  %v30 = vadd.s32 %v29, 8
  %v31 = vadd.s32 %v29, 16
  %v32 = vadd.s32 %v29, 24
  %v33 = vadd.s32 %v29, 32
  %v34 = vadd.s32 %v29, 40
  %v35 = vadd.s32 %v29, 48
  %v36 = vadd.s32 %v29, 56
  %v37 = vadd.s32 %v29, 64
  %v38 = vadd.s32 %v29, 72
  %v39 = vadd.s32 %v29, 80
  %v40 = vadd.s32 %v29, 88
  %v41 = vadd.s32 %v29, 96
  %v42 = vadd.s32 %v29, 104
  %v43 = vadd.s32 %v29, 112
  %v44 = vadd.s32 %v29, 120
  %v45 = vperm.slane %v27, 0
  %vm46 = vcmp.eq.s32.totalorder %v29, %v45
  %vm47 = vcmp.eq.s32.totalorder %v30, %v45
  %vm48 = vcmp.eq.s32.totalorder %v31, %v45
  %vm49 = vcmp.eq.s32.totalorder %v32, %v45
  %vm50 = vcmp.eq.s32.totalorder %v33, %v45
  %vm51 = vcmp.eq.s32.totalorder %v34, %v45
  %vm52 = vcmp.eq.s32.totalorder %v35, %v45
  %vm53 = vcmp.eq.s32.totalorder %v36, %v45
  %vm54 = vcmp.eq.s32.totalorder %v37, %v45
  %vm55 = vcmp.eq.s32.totalorder %v38, %v45
  %vm56 = vcmp.eq.s32.totalorder %v39, %v45
  %vm57 = vcmp.eq.s32.totalorder %v40, %v45
  %vm58 = vcmp.eq.s32.totalorder %v41, %v45
  %vm59 = vcmp.eq.s32.totalorder %v42, %v45
  %vm60 = vcmp.eq.s32.totalorder %v43, %v45
  %vm61 = vcmp.eq.s32.totalorder %v44, %v45
  %v62 = vsel %vm46, 1, 0
  %v63 = vsel %vm47, 1, 0
  %v64 = vsel %vm48, 1, 0
  %v65 = vsel %vm49, 1, 0
  %v66 = vsel %vm50, 1, 0
  %v67 = vsel %vm51, 1, 0
  %v68 = vsel %vm52, 1, 0
  %v69 = vsel %vm53, 1, 0
  %v70 = vsel %vm54, 1, 0
  %v71 = vsel %vm55, 1, 0
  %v72 = vsel %vm56, 1, 0
  %v73 = vsel %vm57, 1, 0
  %v74 = vsel %vm58, 1, 0
  %v75 = vsel %vm59, 1, 0
  %v76 = vsel %vm60, 1, 0
  %v77 = vsel %vm61, 1, 0
  %v78 = vcvt.s32.f32 %v62
  %v79 = vcvt.s32.f32 %v63
  %v80 = vcvt.s32.f32 %v64
  %v81 = vcvt.s32.f32 %v65
  %v82 = vcvt.s32.f32 %v66
  %v83 = vcvt.s32.f32 %v67
  %v84 = vcvt.s32.f32 %v68
  %v85 = vcvt.s32.f32 %v69
  %v86 = vcvt.s32.f32 %v70
  %v87 = vcvt.s32.f32 %v71
  %v88 = vcvt.s32.f32 %v72
  %v89 = vcvt.s32.f32 %v73
  %v90 = vcvt.s32.f32 %v74
  %v91 = vcvt.s32.f32 %v75
  %v92 = vcvt.s32.f32 %v76
  %v93 = vcvt.s32.f32 %v77
  %94 = vmatpush.msra.mxu0 %v93
  %95 = vmatpush.msra.mxu0 %v92
  %96 = vmatpush.msra.mxu0 %v91
  %97 = vmatpush.msra.mxu0 %v90
  %98 = vmatpush.msra.mxu0 %v89
  %99 = vmatpush.msra.mxu0 %v88
  %100 = vmatpush.msra.mxu0 %v87
  %101 = vmatpush.msra.mxu0 %v86
  %102 = vmatpush.msra.mxu0 %v85
  %103 = vmatpush.msra.mxu0 %v84
  %104 = vmatpush.msra.mxu0 %v83
  %105 = vmatpush.msra.mxu0 %v82
  %106 = vmatpush.msra.mxu0 %v81
  %107 = vmatpush.msra.mxu0 %v80
  %108 = vmatpush.msra.mxu0 %v79
  %109 = vmatpush.msra.mxu0 %v78
  %110 = vmatmul.f32.gmra.mxu0 %v11
  %v111 = vpop.f32.mrf.mxu0
  %v112 = vadd.f32 0.0, %v111
  %113 = vmatmul.f32.gmra.mxu0 %v12
  %v114 = vpop.f32.mrf.mxu0
  %v115 = vadd.f32 0.0, %v114
  %116 = vmatmul.f32.gmra.mxu0 %v13
  %v117 = vpop.f32.mrf.mxu0
  %v118 = vadd.f32 0.0, %v117
  %119 = vmatmul.f32.gmra.mxu0 %v14
  %v120 = vpop.f32.mrf.mxu0
  %v121 = vadd.f32 0.0, %v120
  %122 = vmatmul.f32.gmra.mxu0 %v15
  %v123 = vpop.f32.mrf.mxu0
  %v124 = vadd.f32 0.0, %v123
  %125 = vmatmul.f32.gmra.mxu0 %v16
  %v126 = vpop.f32.mrf.mxu0
  %v127 = vadd.f32 0.0, %v126
  %128 = vmatmul.f32.gmra.mxu0 %v17
  %v129 = vpop.f32.mrf.mxu0
  %v130 = vadd.f32 0.0, %v129
  %131 = vmatmul.f32.gmra.mxu0 %v18
  %v132 = vpop.f32.mrf.mxu0
  %v133 = vadd.f32 0.0, %v132
  %134 = vmatmul.f32.gmra.mxu0 %v19
  %v135 = vpop.f32.mrf.mxu0
  %v136 = vadd.f32 0.0, %v135
  %137 = vmatmul.f32.gmra.mxu0 %v20
  %v138 = vpop.f32.mrf.mxu0
  %v139 = vadd.f32 0.0, %v138
  %140 = vmatmul.f32.gmra.mxu0 %v21
  %v141 = vpop.f32.mrf.mxu0
  %v142 = vadd.f32 0.0, %v141
  %143 = vmatmul.f32.gmra.mxu0 %v22
  %v144 = vpop.f32.mrf.mxu0
  %v145 = vadd.f32 0.0, %v144
  %146 = vmatmul.f32.gmra.mxu0 %v23
  %v147 = vpop.f32.mrf.mxu0
  %v148 = vadd.f32 0.0, %v147
  %149 = vmatmul.f32.gmra.mxu0 %v24
  %v150 = vpop.f32.mrf.mxu0
  %v151 = vadd.f32 0.0, %v150
  %152 = vmatmul.f32.gmra.mxu0 %v25
  %v153 = vpop.f32.mrf.mxu0
  %v154 = vadd.f32 0.0, %v153
  %155 = vmatmul.f32.gmra.mxu0 %v26
  %v156 = vpop.f32.mrf.mxu0
  %v157 = vadd.f32 0.0, %v156
  %158 = vdwg.mxu0
  %v159 = vld [vmem:[%s0 + $0x1] sm:$0x1]
  %v160 = vperm.slane %v159, 0
  %vm161 = vcmp.eq.s32.totalorder %v29, %v160
  %vm162 = vcmp.eq.s32.totalorder %v30, %v160
  %vm163 = vcmp.eq.s32.totalorder %v31, %v160
  %vm164 = vcmp.eq.s32.totalorder %v32, %v160
  %vm165 = vcmp.eq.s32.totalorder %v33, %v160
  %vm166 = vcmp.eq.s32.totalorder %v34, %v160
  %vm167 = vcmp.eq.s32.totalorder %v35, %v160
  %vm168 = vcmp.eq.s32.totalorder %v36, %v160
  %vm169 = vcmp.eq.s32.totalorder %v37, %v160
  %vm170 = vcmp.eq.s32.totalorder %v38, %v160
  %vm171 = vcmp.eq.s32.totalorder %v39, %v160
  %vm172 = vcmp.eq.s32.totalorder %v40, %v160
  %vm173 = vcmp.eq.s32.totalorder %v41, %v160
  %vm174 = vcmp.eq.s32.totalorder %v42, %v160
  %vm175 = vcmp.eq.s32.totalorder %v43, %v160
  %vm176 = vcmp.eq.s32.totalorder %v44, %v160
  %v177 = vsel %vm161, 1, 0
  %v178 = vsel %vm162, 1, 0
  %v179 = vsel %vm163, 1, 0
  %v180 = vsel %vm164, 1, 0
  %v181 = vsel %vm165, 1, 0
  %v182 = vsel %vm166, 1, 0
  %v183 = vsel %vm167, 1, 0
  %v184 = vsel %vm168, 1, 0
  %v185 = vsel %vm169, 1, 0
  %v186 = vsel %vm170, 1, 0
  %v187 = vsel %vm171, 1, 0
  %v188 = vsel %vm172, 1, 0
  %v189 = vsel %vm173, 1, 0
  %v190 = vsel %vm174, 1, 0
  %v191 = vsel %vm175, 1, 0
  %v192 = vsel %vm176, 1, 0
  %v193 = vcvt.s32.f32 %v177
  %v194 = vcvt.s32.f32 %v178
  %v195 = vcvt.s32.f32 %v179
  %v196 = vcvt.s32.f32 %v180
  %v197 = vcvt.s32.f32 %v181
  %v198 = vcvt.s32.f32 %v182
  %v199 = vcvt.s32.f32 %v183
  %v200 = vcvt.s32.f32 %v184
  %v201 = vcvt.s32.f32 %v185
  %v202 = vcvt.s32.f32 %v186
  %v203 = vcvt.s32.f32 %v187
  %v204 = vcvt.s32.f32 %v188
  %v205 = vcvt.s32.f32 %v189
  %v206 = vcvt.s32.f32 %v190
  %v207 = vcvt.s32.f32 %v191
  %v208 = vcvt.s32.f32 %v192
  %209 = vmatpush.msra.mxu0 %v208
  %210 = vmatpush.msra.mxu0 %v207
  %211 = vmatpush.msra.mxu0 %v206
  %212 = vmatpush.msra.mxu0 %v205
  %213 = vmatpush.msra.mxu0 %v204
  %214 = vmatpush.msra.mxu0 %v203
  %215 = vmatpush.msra.mxu0 %v202
  %216 = vmatpush.msra.mxu0 %v201
  %217 = vmatpush.msra.mxu0 %v200
  %218 = vmatpush.msra.mxu0 %v199
  %219 = vmatpush.msra.mxu0 %v198
  %220 = vmatpush.msra.mxu0 %v197
  %221 = vmatpush.msra.mxu0 %v196
  %222 = vmatpush.msra.mxu0 %v195
  %223 = vmatpush.msra.mxu0 %v194
  %224 = vmatpush.msra.mxu0 %v193
  %225 = vmatmul.f32.gmra.mxu0 %v11
  %v226 = vpop.f32.mrf.mxu0
  %v227 = vadd.f32 0.0, %v226
  %228 = vmatmul.f32.gmra.mxu0 %v12
  %v229 = vpop.f32.mrf.mxu0
  %v230 = vadd.f32 0.0, %v229
  %231 = vmatmul.f32.gmra.mxu0 %v13
  %v232 = vpop.f32.mrf.mxu0
  %v233 = vadd.f32 0.0, %v232
  %234 = vmatmul.f32.gmra.mxu0 %v14
  %v235 = vpop.f32.mrf.mxu0
  %v236 = vadd.f32 0.0, %v235
  %237 = vmatmul.f32.gmra.mxu0 %v15
  %v238 = vpop.f32.mrf.mxu0
  %v239 = vadd.f32 0.0, %v238
  %240 = vmatmul.f32.gmra.mxu0 %v16
  %v241 = vpop.f32.mrf.mxu0
  %v242 = vadd.f32 0.0, %v241
  %243 = vmatmul.f32.gmra.mxu0 %v17
  %v244 = vpop.f32.mrf.mxu0
  %v245 = vadd.f32 0.0, %v244
  %246 = vmatmul.f32.gmra.mxu0 %v18
  %v247 = vpop.f32.mrf.mxu0
  %v248 = vadd.f32 0.0, %v247
  %249 = vmatmul.f32.gmra.mxu0 %v19
  %v250 = vpop.f32.mrf.mxu0
  %v251 = vadd.f32 0.0, %v250
  %252 = vmatmul.f32.gmra.mxu0 %v20
  %v253 = vpop.f32.mrf.mxu0
  %v254 = vadd.f32 0.0, %v253
  %255 = vmatmul.f32.gmra.mxu0 %v21
  %v256 = vpop.f32.mrf.mxu0
  %v257 = vadd.f32 0.0, %v256
  %258 = vmatmul.f32.gmra.mxu0 %v22
  %v259 = vpop.f32.mrf.mxu0
  %v260 = vadd.f32 0.0, %v259
  %261 = vmatmul.f32.gmra.mxu0 %v23
  %v262 = vpop.f32.mrf.mxu0
  %v263 = vadd.f32 0.0, %v262
  %264 = vmatmul.f32.gmra.mxu0 %v24
  %v265 = vpop.f32.mrf.mxu0
  %v266 = vadd.f32 0.0, %v265
  %267 = vmatmul.f32.gmra.mxu0 %v25
  %v268 = vpop.f32.mrf.mxu0
  %v269 = vadd.f32 0.0, %v268
  %270 = vmatmul.f32.gmra.mxu0 %v26
  %v271 = vpop.f32.mrf.mxu0
  %v272 = vadd.f32 0.0, %v271
  %273 = vdwg.mxu0
  %v274 = vmul.f32 %v112, %v227
  %v275 = vmul.f32 %v115, %v230
  %v276 = vmul.f32 %v118, %v233
  %v277 = vmul.f32 %v121, %v236
  %v278 = vmul.f32 %v124, %v239
  %v279 = vmul.f32 %v127, %v242
  %v280 = vmul.f32 %v130, %v245
  %v281 = vmul.f32 %v133, %v248
  %v282 = vmul.f32 %v136, %v251
  %v283 = vmul.f32 %v139, %v254
  %v284 = vmul.f32 %v142, %v257
  %v285 = vmul.f32 %v145, %v260
  %v286 = vmul.f32 %v148, %v263
  %v287 = vmul.f32 %v151, %v266
  %v288 = vmul.f32 %v154, %v269
  %v289 = vmul.f32 %v157, %v272
  %v290 = vadd.f32 %v274, %v275
  %v291 = vadd.f32 %v290, %v276
  %v292 = vadd.f32 %v291, %v277
  %v293 = vadd.f32 %v292, %v278
  %v294 = vadd.f32 %v293, %v279
  %v295 = vadd.f32 %v294, %v280
  %v296 = vadd.f32 %v295, %v281
  %v297 = vadd.f32 %v296, %v282
  %v298 = vadd.f32 %v297, %v283
  %v299 = vadd.f32 %v298, %v284
  %v300 = vadd.f32 %v299, %v285
  %v301 = vadd.f32 %v300, %v286
  %v302 = vadd.f32 %v301, %v287
  %v303 = vadd.f32 %v302, %v288
  %v304 = vadd.f32 %v303, %v289
  %v305 = vrot.slane %v304, 4
  %v306 = vadd.f32 %v304, %v305
  %v307 = vrot.slane %v306, 2
  %v308 = vadd.f32 %v306, %v307
  %v309 = vrot.slane %v308, 1
  %v310 = vadd.f32 %v308, %v309
  %v311 = vxor.u32 %v310, 2147483648
  %v312 = vmul.f32 %v311, 1.442695
  %v313 = vpow.pop %v312
  %v314 = vadd.f32 %v313, 1.0
  %v315 = vrcp.pop %v314
  %v316 = vmul.f32 %v314, %v315
  %v317 = vsub.f32 1.0, %v316
  %v318 = vmul.f32 %v315, %v317
  %v319 = vadd.f32 %v315, %v318
  %vm320 = vweird.f32 %v314
  %vm321 = vweird.f32 %v315
  %vm322 = vmor %vm320, %vm321
  %v323 = vsel %vm322, %v315, %v319
  %v324 = vand.u32 2147483647, %v314
  %vm325 = vcmp.eq.f32.partialorder %v324, 8.507059e+37
  %v326 = vand.u32 %v314, 2147483648
  %v327 = vor.u32 1.1754944e-38, %v326
  %v328 = vsel %vm325, %v327, %v323
  %v329 = vmul.f32 1.0, %v328
  %330 = vst [vmem:[%s2] sm:$0x1] %v329
  // Predicated region
  $region10: #{gcnmasker_forward.9} parent=0 // pred_check
    _
  $region11: #{gcnmasker_forward.9} parent=0 // pred_check_branch
    %332 = sbr.rel (0) target = $region13
  $region12: #{gcnmasker_forward.9} parent=0 // pred_region
    _
  $region13: #{gcnmasker_forward.9} parent=0 // pred_fallthru
    _
  // Predicated region
  $region14: #{gcnmasker_forward.9} parent=0 // pred_check
    _
  $region15: #{gcnmasker_forward.9} parent=0 // pred_check_branch
    %334 = sbr.rel (0) target = $region17
  $region16: #{gcnmasker_forward.9} parent=0 // pred_region
    _
  $region17: #{gcnmasker_forward.9} parent=0 // pred_fallthru
    _

</llo_original>
